<compile_context>
chip_gen: v6e
topology: v6e:2x2x1
jax: 0.10.0
libtpu: 0.0.40
codegen_flags: <defaults>
</compile_context>

<pallas_src>
import numpy as np
import jax
import jax.numpy as jnp
from jax import lax
from jax.experimental import pallas as pl
from jax.experimental.pallas import tpu as pltpu

_K = 7        # fused kernel size
_CT = 128     # channel (lane) tile
_W_SUB = 8    # sublane alignment for the width dim


def _round_up(x, m):
    return (x + m - 1) // m * m


# ----------------------------------------------------------------------------
# Pallas kernel: fused depthwise 7x7 conv (+identity folded in) + bias, NHWC,
# one (batch, channel-tile) block per grid step, register-blocked per row.
# ----------------------------------------------------------------------------
def _ppeg_dwconv_kernel(xp_ref, w_ref, b_ref, o_ref):
    # xp_ref: (1, HS + K - 1, Wpt, CT)  zero-padded input row-strip
    # w_ref : (K, K, CT)                fused per-channel kernel
    # b_ref : (1, CT)                   fused bias
    # o_ref : (1, HS, Wt, CT)
    _, HS, Wt, CT = o_ref.shape
    K = w_ref.shape[0]
    Wpt = xp_ref.shape[2]

    # Hoist weight/bias handling out of the tap loops: one ref load + cast.
    w = w_ref[...].astype(jnp.float32)        # (K, K, CT), a handful of vregs
    bias = b_ref[0, :].astype(jnp.float32)    # (CT,)

    # Register-blocked accumulation, one output row at a time: the (Wt, CT)
    # accumulator lives in vregs for the whole 49-tap sum and is stored exactly
    # once (≈1 vst per output vreg instead of 49 VMEM accumulator round-trips).
    @pl.loop(0, HS)
    def _(h):
        acc = jnp.broadcast_to(bias, (Wt, CT))          # bias-init, no zeros pass
        for di in range(K):
            row = xp_ref[0, h + di, :, :].astype(jnp.float32)   # (Wpt, CT)
            for dj in range(K):
                if dj == 0:
                    shifted = row[:Wt, :]
                else:
                    # Width shift on the XLU (has slack while the VPU binds).
                    # Wpt >= Wt + K - 1, so the roll wraparound never lands in
                    # the kept [0:Wt) window.
                    shifted = pltpu.roll(row, shift=Wpt - dj, axis=0)[:Wt, :]
                acc = acc + shifted * w[di, dj, :]
        o_ref[0, h, :, :] = acc.astype(o_ref.dtype)
    # TODO(synk): optional bf16 multiply path (f32 accumulate) for v6e/v7x,
    # gated on an accuracy check.


def _ppeg_strip_call(xp_strip, w_eff, b_eff, hs):
    """One pallas_call over a zero-padded row strip. xp_strip: (B, hs+6, Wpt, Cp)."""
    B, hpad, Wpt, Cp = xp_strip.shape
    assert hpad == hs + _K - 1 and Cp % _CT == 0
    Wt = Wpt - _W_SUB
    n_ct = Cp // _CT

    in_block = (1, hpad, Wpt, _CT)
    out_block = (1, hs, Wt, _CT)
    blk_bytes = lambda s: int(np.prod(s)) * 4
    # Double-buffered in/out blocks + weights + margin; capped well below the
    # 64 MiB physical VMEM of a v7x TensorCore to leave compiler headroom.
    need = (2 * (blk_bytes(in_block) + blk_bytes(out_block))
            + 2 * (blk_bytes((_K, _K, _CT)) + blk_bytes((1, _CT))) + (4 << 20))
    vmem_limit = int(min(max(need, 24 << 20), 48 << 20))

    return pl.pallas_call(
        _ppeg_dwconv_kernel,
        out_shape=jax.ShapeDtypeStruct((B, hs, Wt, Cp), xp_strip.dtype),
        grid=(B, n_ct),
        in_specs=[
            pl.BlockSpec(in_block, lambda b, c: (b, 0, 0, c)),
            pl.BlockSpec((_K, _K, _CT), lambda b, c: (0, 0, c)),
            pl.BlockSpec((1, _CT), lambda b, c: (0, c)),
        ],
        out_specs=pl.BlockSpec(out_block, lambda b, c: (b, 0, 0, c)),
        compiler_params=pltpu.CompilerParams(
            dimension_semantics=("parallel", "parallel"),
            vmem_limit_bytes=vmem_limit,
        ),
    )(xp_strip, w_eff, b_eff)


def ppeg_fused_dwconv(xp, w_eff, b_eff, H, row_budget_bytes=8 << 20):
    """xp: (B, H+6, Wpt, Cp) zero-padded NHWC image; returns (B, H, Wt, Cp)."""
    B, Hp, Wpt, Cp = xp.shape
    assert Hp == H + _K - 1
    # Row-strip chunking: bounds the per-grid-step VMEM footprint independent of
    # N (v7x: 64 MiB VMEM/TC) and multiplies grid steps for small B.  Strips
    # overlap by the 6-row halo (tiny duplicated HBM traffic).
    rows_bytes = Wpt * _CT * 4
    hs_max = max(8, row_budget_bytes // rows_bytes - (_K - 1))
    if H <= hs_max:
        return _ppeg_strip_call(xp, w_eff, b_eff, H)
    outs = []
    h0 = 0
    while h0 < H:
        hs = int(min(hs_max, H - h0))
        outs.append(_ppeg_strip_call(xp[:, h0:h0 + hs + _K - 1], w_eff, b_eff, hs))
        h0 += hs
    return jnp.concatenate(outs, axis=1)


# ----------------------------------------------------------------------------
# PPEG forward (wrapper): sequence padding, layout, kernel folding, trimming.
# ----------------------------------------------------------------------------
def fold_ppeg_params(w7, b7, w5, b5, w3, b3, c_pad):
    """Fold the three depthwise convs + identity into one 7x7 depthwise kernel.

    w7: (C,7,7), w5: (C,5,5), w3: (C,3,3), biases: (C,)
    Returns w_eff (7,7,c_pad), b_eff (1,c_pad), zero-padded on the channel dim.
    """
    C = w7.shape[0]
    w_eff = w7
    w_eff = w_eff.at[:, 1:6, 1:6].add(w5)
    w_eff = w_eff.at[:, 2:5, 2:5].add(w3)
    w_eff = w_eff.at[:, 3, 3].add(1.0)          # identity (cnn_feat) term
    b_eff = (b7 + b5 + b3).reshape(1, C)
    w_eff = jnp.transpose(w_eff, (1, 2, 0))     # (7,7,C)
    if c_pad > C:
        w_eff = jnp.pad(w_eff, ((0, 0), (0, 0), (0, c_pad - C)))
        b_eff = jnp.pad(b_eff, ((0, 0), (0, c_pad - C)))
    return w_eff, b_eff


def ppeg_forward(x, w7, b7, w5, b5, w3, b3, row_budget_bytes=8 << 20):
    """x: (B, N, C) float32 -> (B, N, C), matching the PyTorch PPEG.forward."""
    B, N, C = x.shape
    H = W = int(np.ceil(np.sqrt(N)))
    add_length = H * W - N
    x = jnp.concatenate([x, x[:, :add_length, :]], axis=1)
    if H < 7:
        H = W = 7
        zero_pad = H * W - x.shape[1]
        x = jnp.concatenate(
            [x, jnp.zeros((B, zero_pad, C), dtype=x.dtype)], axis=1)
        add_length += zero_pad

    feat = x.reshape(B, H, W, C)          # NHWC, token n -> (n // W, n % W)

    # Single jnp.pad covering:
    #  * H: 3-row zero halo top/bottom (half of the fused 7x7 kernel),
    #  * W: 3-col left halo; right pad so the output width Wt is a multiple of 8
    #    (unmasked sublane stores) and every dj-shifted window is in-bounds,
    #  * C: pad to a multiple of 128 (lane-dense channel tiles).
    # TODO(synk): fold the 3-wide zero halo into the kernel (zero-init + masked
    # edge taps) to avoid this extra HBM round-trip of the activations (v5e).
    Wt = _round_up(W, _W_SUB)
    Cp = _round_up(C, _CT)
    Wpt = Wt + _W_SUB
    xp = jnp.pad(feat, ((0, 0), (3, 3), (3, Wpt - 3 - W), (0, Cp - C)))

    w_eff, b_eff = fold_ppeg_params(w7, b7, w5, b5, w3, b3, Cp)
    out = ppeg_fused_dwconv(xp, w_eff, b_eff, H, row_budget_bytes)  # (B,H,Wt,Cp)

    out = out[:, :, :W, :C].reshape(B, H * W, C)
    if add_length > 0:
        out = out[:, :-add_length]
    return out


# ----------------------------------------------------------------------------
# Pure-JAX reference (mirrors the PyTorch module with three separate convs).
# ----------------------------------------------------------------------------
def ppeg_reference(x, w7, b7, w5, b5, w3, b3):
    B, N, C = x.shape
    H = W = int(np.ceil(np.sqrt(N)))
    add_length = H * W - N
    x = jnp.concatenate([x, x[:, :add_length, :]], axis=1)
    if H < 7:
        H = W = 7
        zero_pad = H * W - x.shape[1]
        x = jnp.concatenate(
            [x, jnp.zeros((B, zero_pad, C), dtype=x.dtype)], axis=1)
        add_length += zero_pad

    cnn_feat = jnp.transpose(x, (0, 2, 1)).reshape(B, C, H, W)   # NCHW

    def dwconv(inp, w, b, k):
        w = w.reshape(C, 1, k, k)  # OIHW with groups=C
        out = lax.conv_general_dilated(
            inp, w, window_strides=(1, 1),
            padding=((k // 2, k // 2), (k // 2, k // 2)),
            dimension_numbers=("NCHW", "OIHW", "NCHW"),
            feature_group_count=C)
        return out + b.reshape(1, C, 1, 1)

    y = (dwconv(cnn_feat, w7, b7, 7) + cnn_feat
         + dwconv(cnn_feat, w5, b5, 5) + dwconv(cnn_feat, w3, b3, 3))
    y = jnp.transpose(y.reshape(B, C, H * W), (0, 2, 1))
    if add_length > 0:
        y = y[:, :-add_length]
    return y


# ----------------------------------------------------------------------------
def _run_case(key, B, N, C, row_budget_bytes=8 << 20):
    kx, k7w, k7b, k5w, k5b, k3w, k3b = jax.random.split(key, 7)

    x = jax.random.normal(kx, (B, N, C), dtype=jnp.float32)

    # Depthwise conv params (PyTorch shapes: (dim, 1, k, k) squeezed, bias (dim,))
    w7 = 0.05 * jax.random.normal(k7w, (C, 7, 7), dtype=jnp.float32)
    b7 = 0.05 * jax.random.normal(k7b, (C,), dtype=jnp.float32)
    w5 = 0.05 * jax.random.normal(k5w, (C, 5, 5), dtype=jnp.float32)
    b5 = 0.05 * jax.random.normal(k5b, (C,), dtype=jnp.float32)
    w3 = 0.05 * jax.random.normal(k3w, (C, 3, 3), dtype=jnp.float32)
    b3 = 0.05 * jax.random.normal(k3b, (C,), dtype=jnp.float32)

    out = jax.block_until_ready(
        ppeg_forward(x, w7, b7, w5, b5, w3, b3, row_budget_bytes))
    ref = jax.block_until_ready(ppeg_reference(x, w7, b7, w5, b5, w3, b3))

    assert out.shape == (B, N, C), out.shape
    np.testing.assert_allclose(np.asarray(out), np.asarray(ref),
                               rtol=1e-4, atol=1e-4)


if __name__ == "__main__":
    key = jax.random.PRNGKey(0)
    k1, k2, k3 = jax.random.split(key, 3)

    # Case 1: C multiple of 128 -> two channel tiles; exercises the H<7
    # zero-pad branch of the module.
    _run_case(k1, B=2, N=8, C=256)

    # Case 2: small C (padded up to one 128-lane tile) and the H>=7 wrap-pad
    # branch, non-multiple-of-8 width.
    _run_case(k2, B=1, N=50, C=32)

    # Case 3: tiny row budget to force the row-strip chunking path (two strips
    # with a 6-row halo overlap).
    _run_case(k3, B=1, N=200, C=128, row_budget_bytes=64 * 1024)

    print("KERNEL_OK")
</pallas_src>

<mosaic_0001>
module attributes {stable_mosaic.version = 11 : i64} {
  func.func @_ppeg_dwconv_kernel(%arg0: i32, %arg1: i32, %arg2: memref<1x13x16x128xf32, #tpu.memory_space<vmem>>, %arg3: memref<7x7x128xf32, #tpu.memory_space<vmem>>, %arg4: memref<1x128xf32, #tpu.memory_space<vmem>>, %arg5: memref<1x7x8x128xf32, #tpu.memory_space<vmem>>) attributes {dimension_semantics = [#tpu.dimension_semantics<parallel>, #tpu.dimension_semantics<parallel>], iteration_bounds = array<i64: 2, 2>, scalar_prefetch = 0 : i64, scratch_operands = 0 : i64, tpu.core_type = #tpu.core_type<tc>, window_params = [{transform_indices = @transform_0, window_bounds = array<i64: 1, 13, 16, 128>}, {transform_indices = @transform_1, window_bounds = array<i64: 7, 7, 128>}, {transform_indices = @transform_2, window_bounds = array<i64: 1, 128>}, {transform_indices = @transform_3, window_bounds = array<i64: 1, 7, 8, 128>}]} {
    %c0 = arith.constant 0 : index
    %c0_0 = arith.constant 0 : index
    %c0_1 = arith.constant 0 : index
    %0 = vector.load %arg3[%c0, %c0_0, %c0_1] : memref<7x7x128xf32, #tpu.memory_space<vmem>>, vector<7x7x128xf32>
    %c0_2 = arith.constant 0 : index
    %c0_3 = arith.constant 0 : index
    %1 = vector.load %arg4[%c0_2, %c0_3] : memref<1x128xf32, #tpu.memory_space<vmem>>, vector<1x128xf32>
    %2 = vector.shape_cast %1 : vector<1x128xf32> to vector<128xf32>
    %c0_i32 = arith.constant 0 : i32
    %c7_i32 = arith.constant 7 : i32
    %3 = arith.addi %c0_i32, %c7_i32 : i32
    %c1_i32 = arith.constant 1 : i32
    scf.for %arg6 = %c0_i32 to %3 step %c1_i32  : i32 {
      %c1_i32_5 = arith.constant 1 : i32
      %4 = arith.muli %arg6, %c1_i32_5 : i32
      %c0_i32_6 = arith.constant 0 : i32
      %5 = arith.addi %c0_i32_6, %4 : i32
      %6 = vector.shape_cast %2 : vector<128xf32> to vector<1x128xf32>
      %7 = vector.broadcast %6 : vector<1x128xf32> to vector<8x128xf32>
      %c0_i32_7 = arith.constant 0 : i32
      %8 = arith.addi %5, %c0_i32_7 : i32
      %c0_8 = arith.constant 0 : index
      %9 = arith.index_cast %8 : i32 to index
      %c0_9 = arith.constant 0 : index
      %c0_10 = arith.constant 0 : index
      %10 = vector.load %arg2[%c0_8, %9, %c0_9, %c0_10] : memref<1x13x16x128xf32, #tpu.memory_space<vmem>>, vector<1x1x16x128xf32>
      %11 = vector.shape_cast %10 : vector<1x1x16x128xf32> to vector<16x128xf32>
      %12 = vector.extract_strided_slice %11 {offsets = [0, 0], sizes = [8, 128], strides = [1, 1]} : vector<16x128xf32> to vector<8x128xf32>
      %13 = vector.extract_strided_slice %0 {offsets = [0, 0, 0], sizes = [1, 1, 128], strides = [1, 1, 1]} : vector<7x7x128xf32> to vector<1x1x128xf32>
      %14 = vector.shape_cast %13 : vector<1x1x128xf32> to vector<128xf32>
      %15 = vector.shape_cast %14 : vector<128xf32> to vector<1x128xf32>
      %16 = vector.broadcast %15 : vector<1x128xf32> to vector<8x128xf32>
      %17 = arith.mulf %12, %16 : vector<8x128xf32>
      %18 = arith.addf %7, %17 : vector<8x128xf32>
      %c15_i32 = arith.constant 15 : i32
      %19 = tpu.dynamic_rotate %11 by %c15_i32 dim 0 : vector<16x128xf32>, i32 -> vector<16x128xf32>
      %20 = vector.extract_strided_slice %19 {offsets = [0, 0], sizes = [8, 128], strides = [1, 1]} : vector<16x128xf32> to vector<8x128xf32>
      %21 = vector.extract_strided_slice %0 {offsets = [0, 1, 0], sizes = [1, 1, 128], strides = [1, 1, 1]} : vector<7x7x128xf32> to vector<1x1x128xf32>
      %22 = vector.shape_cast %21 : vector<1x1x128xf32> to vector<128xf32>
      %23 = vector.shape_cast %22 : vector<128xf32> to vector<1x128xf32>
      %24 = vector.broadcast %23 : vector<1x128xf32> to vector<8x128xf32>
      %25 = arith.mulf %20, %24 : vector<8x128xf32>
      %26 = arith.addf %18, %25 : vector<8x128xf32>
      %c14_i32 = arith.constant 14 : i32
      %27 = tpu.dynamic_rotate %11 by %c14_i32 dim 0 : vector<16x128xf32>, i32 -> vector<16x128xf32>
      %28 = vector.extract_strided_slice %27 {offsets = [0, 0], sizes = [8, 128], strides = [1, 1]} : vector<16x128xf32> to vector<8x128xf32>
      %29 = vector.extract_strided_slice %0 {offsets = [0, 2, 0], sizes = [1, 1, 128], strides = [1, 1, 1]} : vector<7x7x128xf32> to vector<1x1x128xf32>
      %30 = vector.shape_cast %29 : vector<1x1x128xf32> to vector<128xf32>
      %31 = vector.shape_cast %30 : vector<128xf32> to vector<1x128xf32>
      %32 = vector.broadcast %31 : vector<1x128xf32> to vector<8x128xf32>
      %33 = arith.mulf %28, %32 : vector<8x128xf32>
      %34 = arith.addf %26, %33 : vector<8x128xf32>
      %c13_i32 = arith.constant 13 : i32
      %35 = tpu.dynamic_rotate %11 by %c13_i32 dim 0 : vector<16x128xf32>, i32 -> vector<16x128xf32>
      %36 = vector.extract_strided_slice %35 {offsets = [0, 0], sizes = [8, 128], strides = [1, 1]} : vector<16x128xf32> to vector<8x128xf32>
      %37 = vector.extract_strided_slice %0 {offsets = [0, 3, 0], sizes = [1, 1, 128], strides = [1, 1, 1]} : vector<7x7x128xf32> to vector<1x1x128xf32>
      %38 = vector.shape_cast %37 : vector<1x1x128xf32> to vector<128xf32>
      %39 = vector.shape_cast %38 : vector<128xf32> to vector<1x128xf32>
      %40 = vector.broadcast %39 : vector<1x128xf32> to vector<8x128xf32>
      %41 = arith.mulf %36, %40 : vector<8x128xf32>
      %42 = arith.addf %34, %41 : vector<8x128xf32>
      %c12_i32 = arith.constant 12 : i32
      %43 = tpu.dynamic_rotate %11 by %c12_i32 dim 0 : vector<16x128xf32>, i32 -> vector<16x128xf32>
      %44 = vector.extract_strided_slice %43 {offsets = [0, 0], sizes = [8, 128], strides = [1, 1]} : vector<16x128xf32> to vector<8x128xf32>
      %45 = vector.extract_strided_slice %0 {offsets = [0, 4, 0], sizes = [1, 1, 128], strides = [1, 1, 1]} : vector<7x7x128xf32> to vector<1x1x128xf32>
      %46 = vector.shape_cast %45 : vector<1x1x128xf32> to vector<128xf32>
      %47 = vector.shape_cast %46 : vector<128xf32> to vector<1x128xf32>
      %48 = vector.broadcast %47 : vector<1x128xf32> to vector<8x128xf32>
      %49 = arith.mulf %44, %48 : vector<8x128xf32>
      %50 = arith.addf %42, %49 : vector<8x128xf32>
      %c11_i32 = arith.constant 11 : i32
      %51 = tpu.dynamic_rotate %11 by %c11_i32 dim 0 : vector<16x128xf32>, i32 -> vector<16x128xf32>
      %52 = vector.extract_strided_slice %51 {offsets = [0, 0], sizes = [8, 128], strides = [1, 1]} : vector<16x128xf32> to vector<8x128xf32>
      %53 = vector.extract_strided_slice %0 {offsets = [0, 5, 0], sizes = [1, 1, 128], strides = [1, 1, 1]} : vector<7x7x128xf32> to vector<1x1x128xf32>
      %54 = vector.shape_cast %53 : vector<1x1x128xf32> to vector<128xf32>
      %55 = vector.shape_cast %54 : vector<128xf32> to vector<1x128xf32>
      %56 = vector.broadcast %55 : vector<1x128xf32> to vector<8x128xf32>
      %57 = arith.mulf %52, %56 : vector<8x128xf32>
      %58 = arith.addf %50, %57 : vector<8x128xf32>
      %c10_i32 = arith.constant 10 : i32
      %59 = tpu.dynamic_rotate %11 by %c10_i32 dim 0 : vector<16x128xf32>, i32 -> vector<16x128xf32>
      %60 = vector.extract_strided_slice %59 {offsets = [0, 0], sizes = [8, 128], strides = [1, 1]} : vector<16x128xf32> to vector<8x128xf32>
      %61 = vector.extract_strided_slice %0 {offsets = [0, 6, 0], sizes = [1, 1, 128], strides = [1, 1, 1]} : vector<7x7x128xf32> to vector<1x1x128xf32>
      %62 = vector.shape_cast %61 : vector<1x1x128xf32> to vector<128xf32>
      %63 = vector.shape_cast %62 : vector<128xf32> to vector<1x128xf32>
      %64 = vector.broadcast %63 : vector<1x128xf32> to vector<8x128xf32>
      %65 = arith.mulf %60, %64 : vector<8x128xf32>
      %66 = arith.addf %58, %65 : vector<8x128xf32>
      %c1_i32_11 = arith.constant 1 : i32
      %67 = arith.addi %5, %c1_i32_11 : i32
      %c0_12 = arith.constant 0 : index
      %68 = arith.index_cast %67 : i32 to index
      %c0_13 = arith.constant 0 : index
      %c0_14 = arith.constant 0 : index
      %69 = vector.load %arg2[%c0_12, %68, %c0_13, %c0_14] : memref<1x13x16x128xf32, #tpu.memory_space<vmem>>, vector<1x1x16x128xf32>
      %70 = vector.shape_cast %69 : vector<1x1x16x128xf32> to vector<16x128xf32>
      %71 = vector.extract_strided_slice %70 {offsets = [0, 0], sizes = [8, 128], strides = [1, 1]} : vector<16x128xf32> to vector<8x128xf32>
      %72 = vector.extract_strided_slice %0 {offsets = [1, 0, 0], sizes = [1, 1, 128], strides = [1, 1, 1]} : vector<7x7x128xf32> to vector<1x1x128xf32>
      %73 = vector.shape_cast %72 : vector<1x1x128xf32> to vector<128xf32>
      %74 = vector.shape_cast %73 : vector<128xf32> to vector<1x128xf32>
      %75 = vector.broadcast %74 : vector<1x128xf32> to vector<8x128xf32>
      %76 = arith.mulf %71, %75 : vector<8x128xf32>
      %77 = arith.addf %66, %76 : vector<8x128xf32>
      %c15_i32_15 = arith.constant 15 : i32
      %78 = tpu.dynamic_rotate %70 by %c15_i32_15 dim 0 : vector<16x128xf32>, i32 -> vector<16x128xf32>
      %79 = vector.extract_strided_slice %78 {offsets = [0, 0], sizes = [8, 128], strides = [1, 1]} : vector<16x128xf32> to vector<8x128xf32>
      %80 = vector.extract_strided_slice %0 {offsets = [1, 1, 0], sizes = [1, 1, 128], strides = [1, 1, 1]} : vector<7x7x128xf32> to vector<1x1x128xf32>
      %81 = vector.shape_cast %80 : vector<1x1x128xf32> to vector<128xf32>
      %82 = vector.shape_cast %81 : vector<128xf32> to vector<1x128xf32>
      %83 = vector.broadcast %82 : vector<1x128xf32> to vector<8x128xf32>
      %84 = arith.mulf %79, %83 : vector<8x128xf32>
      %85 = arith.addf %77, %84 : vector<8x128xf32>
      %c14_i32_16 = arith.constant 14 : i32
      %86 = tpu.dynamic_rotate %70 by %c14_i32_16 dim 0 : vector<16x128xf32>, i32 -> vector<16x128xf32>
      %87 = vector.extract_strided_slice %86 {offsets = [0, 0], sizes = [8, 128], strides = [1, 1]} : vector<16x128xf32> to vector<8x128xf32>
      %88 = vector.extract_strided_slice %0 {offsets = [1, 2, 0], sizes = [1, 1, 128], strides = [1, 1, 1]} : vector<7x7x128xf32> to vector<1x1x128xf32>
      %89 = vector.shape_cast %88 : vector<1x1x128xf32> to vector<128xf32>
      %90 = vector.shape_cast %89 : vector<128xf32> to vector<1x128xf32>
      %91 = vector.broadcast %90 : vector<1x128xf32> to vector<8x128xf32>
      %92 = arith.mulf %87, %91 : vector<8x128xf32>
      %93 = arith.addf %85, %92 : vector<8x128xf32>
      %c13_i32_17 = arith.constant 13 : i32
      %94 = tpu.dynamic_rotate %70 by %c13_i32_17 dim 0 : vector<16x128xf32>, i32 -> vector<16x128xf32>
      %95 = vector.extract_strided_slice %94 {offsets = [0, 0], sizes = [8, 128], strides = [1, 1]} : vector<16x128xf32> to vector<8x128xf32>
      %96 = vector.extract_strided_slice %0 {offsets = [1, 3, 0], sizes = [1, 1, 128], strides = [1, 1, 1]} : vector<7x7x128xf32> to vector<1x1x128xf32>
      %97 = vector.shape_cast %96 : vector<1x1x128xf32> to vector<128xf32>
      %98 = vector.shape_cast %97 : vector<128xf32> to vector<1x128xf32>
      %99 = vector.broadcast %98 : vector<1x128xf32> to vector<8x128xf32>
      %100 = arith.mulf %95, %99 : vector<8x128xf32>
      %101 = arith.addf %93, %100 : vector<8x128xf32>
      %c12_i32_18 = arith.constant 12 : i32
      %102 = tpu.dynamic_rotate %70 by %c12_i32_18 dim 0 : vector<16x128xf32>, i32 -> vector<16x128xf32>
      %103 = vector.extract_strided_slice %102 {offsets = [0, 0], sizes = [8, 128], strides = [1, 1]} : vector<16x128xf32> to vector<8x128xf32>
      %104 = vector.extract_strided_slice %0 {offsets = [1, 4, 0], sizes = [1, 1, 128], strides = [1, 1, 1]} : vector<7x7x128xf32> to vector<1x1x128xf32>
      %105 = vector.shape_cast %104 : vector<1x1x128xf32> to vector<128xf32>
      %106 = vector.shape_cast %105 : vector<128xf32> to vector<1x128xf32>
      %107 = vector.broadcast %106 : vector<1x128xf32> to vector<8x128xf32>
      %108 = arith.mulf %103, %107 : vector<8x128xf32>
      %109 = arith.addf %101, %108 : vector<8x128xf32>
      %c11_i32_19 = arith.constant 11 : i32
      %110 = tpu.dynamic_rotate %70 by %c11_i32_19 dim 0 : vector<16x128xf32>, i32 -> vector<16x128xf32>
      %111 = vector.extract_strided_slice %110 {offsets = [0, 0], sizes = [8, 128], strides = [1, 1]} : vector<16x128xf32> to vector<8x128xf32>
      %112 = vector.extract_strided_slice %0 {offsets = [1, 5, 0], sizes = [1, 1, 128], strides = [1, 1, 1]} : vector<7x7x128xf32> to vector<1x1x128xf32>
      %113 = vector.shape_cast %112 : vector<1x1x128xf32> to vector<128xf32>
      %114 = vector.shape_cast %113 : vector<128xf32> to vector<1x128xf32>
      %115 = vector.broadcast %114 : vector<1x128xf32> to vector<8x128xf32>
      %116 = arith.mulf %111, %115 : vector<8x128xf32>
      %117 = arith.addf %109, %116 : vector<8x128xf32>
      %c10_i32_20 = arith.constant 10 : i32
      %118 = tpu.dynamic_rotate %70 by %c10_i32_20 dim 0 : vector<16x128xf32>, i32 -> vector<16x128xf32>
      %119 = vector.extract_strided_slice %118 {offsets = [0, 0], sizes = [8, 128], strides = [1, 1]} : vector<16x128xf32> to vector<8x128xf32>
      %120 = vector.extract_strided_slice %0 {offsets = [1, 6, 0], sizes = [1, 1, 128], strides = [1, 1, 1]} : vector<7x7x128xf32> to vector<1x1x128xf32>
      %121 = vector.shape_cast %120 : vector<1x1x128xf32> to vector<128xf32>
      %122 = vector.shape_cast %121 : vector<128xf32> to vector<1x128xf32>
      %123 = vector.broadcast %122 : vector<1x128xf32> to vector<8x128xf32>
      %124 = arith.mulf %119, %123 : vector<8x128xf32>
      %125 = arith.addf %117, %124 : vector<8x128xf32>
      %c2_i32 = arith.constant 2 : i32
      %126 = arith.addi %5, %c2_i32 : i32
      %c0_21 = arith.constant 0 : index
      %127 = arith.index_cast %126 : i32 to index
      %c0_22 = arith.constant 0 : index
      %c0_23 = arith.constant 0 : index
      %128 = vector.load %arg2[%c0_21, %127, %c0_22, %c0_23] : memref<1x13x16x128xf32, #tpu.memory_space<vmem>>, vector<1x1x16x128xf32>
      %129 = vector.shape_cast %128 : vector<1x1x16x128xf32> to vector<16x128xf32>
      %130 = vector.extract_strided_slice %129 {offsets = [0, 0], sizes = [8, 128], strides = [1, 1]} : vector<16x128xf32> to vector<8x128xf32>
      %131 = vector.extract_strided_slice %0 {offsets = [2, 0, 0], sizes = [1, 1, 128], strides = [1, 1, 1]} : vector<7x7x128xf32> to vector<1x1x128xf32>
      %132 = vector.shape_cast %131 : vector<1x1x128xf32> to vector<128xf32>
      %133 = vector.shape_cast %132 : vector<128xf32> to vector<1x128xf32>
      %134 = vector.broadcast %133 : vector<1x128xf32> to vector<8x128xf32>
      %135 = arith.mulf %130, %134 : vector<8x128xf32>
      %136 = arith.addf %125, %135 : vector<8x128xf32>
      %c15_i32_24 = arith.constant 15 : i32
      %137 = tpu.dynamic_rotate %129 by %c15_i32_24 dim 0 : vector<16x128xf32>, i32 -> vector<16x128xf32>
      %138 = vector.extract_strided_slice %137 {offsets = [0, 0], sizes = [8, 128], strides = [1, 1]} : vector<16x128xf32> to vector<8x128xf32>
      %139 = vector.extract_strided_slice %0 {offsets = [2, 1, 0], sizes = [1, 1, 128], strides = [1, 1, 1]} : vector<7x7x128xf32> to vector<1x1x128xf32>
      %140 = vector.shape_cast %139 : vector<1x1x128xf32> to vector<128xf32>
      %141 = vector.shape_cast %140 : vector<128xf32> to vector<1x128xf32>
      %142 = vector.broadcast %141 : vector<1x128xf32> to vector<8x128xf32>
      %143 = arith.mulf %138, %142 : vector<8x128xf32>
      %144 = arith.addf %136, %143 : vector<8x128xf32>
      %c14_i32_25 = arith.constant 14 : i32
      %145 = tpu.dynamic_rotate %129 by %c14_i32_25 dim 0 : vector<16x128xf32>, i32 -> vector<16x128xf32>
      %146 = vector.extract_strided_slice %145 {offsets = [0, 0], sizes = [8, 128], strides = [1, 1]} : vector<16x128xf32> to vector<8x128xf32>
      %147 = vector.extract_strided_slice %0 {offsets = [2, 2, 0], sizes = [1, 1, 128], strides = [1, 1, 1]} : vector<7x7x128xf32> to vector<1x1x128xf32>
      %148 = vector.shape_cast %147 : vector<1x1x128xf32> to vector<128xf32>
      %149 = vector.shape_cast %148 : vector<128xf32> to vector<1x128xf32>
      %150 = vector.broadcast %149 : vector<1x128xf32> to vector<8x128xf32>
      %151 = arith.mulf %146, %150 : vector<8x128xf32>
      %152 = arith.addf %144, %151 : vector<8x128xf32>
      %c13_i32_26 = arith.constant 13 : i32
      %153 = tpu.dynamic_rotate %129 by %c13_i32_26 dim 0 : vector<16x128xf32>, i32 -> vector<16x128xf32>
      %154 = vector.extract_strided_slice %153 {offsets = [0, 0], sizes = [8, 128], strides = [1, 1]} : vector<16x128xf32> to vector<8x128xf32>
      %155 = vector.extract_strided_slice %0 {offsets = [2, 3, 0], sizes = [1, 1, 128], strides = [1, 1, 1]} : vector<7x7x128xf32> to vector<1x1x128xf32>
      %156 = vector.shape_cast %155 : vector<1x1x128xf32> to vector<128xf32>
      %157 = vector.shape_cast %156 : vector<128xf32> to vector<1x128xf32>
      %158 = vector.broadcast %157 : vector<1x128xf32> to vector<8x128xf32>
      %159 = arith.mulf %154, %158 : vector<8x128xf32>
      %160 = arith.addf %152, %159 : vector<8x128xf32>
      %c12_i32_27 = arith.constant 12 : i32
      %161 = tpu.dynamic_rotate %129 by %c12_i32_27 dim 0 : vector<16x128xf32>, i32 -> vector<16x128xf32>
      %162 = vector.extract_strided_slice %161 {offsets = [0, 0], sizes = [8, 128], strides = [1, 1]} : vector<16x128xf32> to vector<8x128xf32>
      %163 = vector.extract_strided_slice %0 {offsets = [2, 4, 0], sizes = [1, 1, 128], strides = [1, 1, 1]} : vector<7x7x128xf32> to vector<1x1x128xf32>
      %164 = vector.shape_cast %163 : vector<1x1x128xf32> to vector<128xf32>
      %165 = vector.shape_cast %164 : vector<128xf32> to vector<1x128xf32>
      %166 = vector.broadcast %165 : vector<1x128xf32> to vector<8x128xf32>
      %167 = arith.mulf %162, %166 : vector<8x128xf32>
      %168 = arith.addf %160, %167 : vector<8x128xf32>
      %c11_i32_28 = arith.constant 11 : i32
      %169 = tpu.dynamic_rotate %129 by %c11_i32_28 dim 0 : vector<16x128xf32>, i32 -> vector<16x128xf32>
      %170 = vector.extract_strided_slice %169 {offsets = [0, 0], sizes = [8, 128], strides = [1, 1]} : vector<16x128xf32> to vector<8x128xf32>
      %171 = vector.extract_strided_slice %0 {offsets = [2, 5, 0], sizes = [1, 1, 128], strides = [1, 1, 1]} : vector<7x7x128xf32> to vector<1x1x128xf32>
      %172 = vector.shape_cast %171 : vector<1x1x128xf32> to vector<128xf32>
      %173 = vector.shape_cast %172 : vector<128xf32> to vector<1x128xf32>
      %174 = vector.broadcast %173 : vector<1x128xf32> to vector<8x128xf32>
      %175 = arith.mulf %170, %174 : vector<8x128xf32>
      %176 = arith.addf %168, %175 : vector<8x128xf32>
      %c10_i32_29 = arith.constant 10 : i32
      %177 = tpu.dynamic_rotate %129 by %c10_i32_29 dim 0 : vector<16x128xf32>, i32 -> vector<16x128xf32>
      %178 = vector.extract_strided_slice %177 {offsets = [0, 0], sizes = [8, 128], strides = [1, 1]} : vector<16x128xf32> to vector<8x128xf32>
      %179 = vector.extract_strided_slice %0 {offsets = [2, 6, 0], sizes = [1, 1, 128], strides = [1, 1, 1]} : vector<7x7x128xf32> to vector<1x1x128xf32>
      %180 = vector.shape_cast %179 : vector<1x1x128xf32> to vector<128xf32>
      %181 = vector.shape_cast %180 : vector<128xf32> to vector<1x128xf32>
      %182 = vector.broadcast %181 : vector<1x128xf32> to vector<8x128xf32>
      %183 = arith.mulf %178, %182 : vector<8x128xf32>
      %184 = arith.addf %176, %183 : vector<8x128xf32>
      %c3_i32 = arith.constant 3 : i32
      %185 = arith.addi %5, %c3_i32 : i32
      %c0_30 = arith.constant 0 : index
      %186 = arith.index_cast %185 : i32 to index
      %c0_31 = arith.constant 0 : index
      %c0_32 = arith.constant 0 : index
      %187 = vector.load %arg2[%c0_30, %186, %c0_31, %c0_32] : memref<1x13x16x128xf32, #tpu.memory_space<vmem>>, vector<1x1x16x128xf32>
      %188 = vector.shape_cast %187 : vector<1x1x16x128xf32> to vector<16x128xf32>
      %189 = vector.extract_strided_slice %188 {offsets = [0, 0], sizes = [8, 128], strides = [1, 1]} : vector<16x128xf32> to vector<8x128xf32>
      %190 = vector.extract_strided_slice %0 {offsets = [3, 0, 0], sizes = [1, 1, 128], strides = [1, 1, 1]} : vector<7x7x128xf32> to vector<1x1x128xf32>
      %191 = vector.shape_cast %190 : vector<1x1x128xf32> to vector<128xf32>
      %192 = vector.shape_cast %191 : vector<128xf32> to vector<1x128xf32>
      %193 = vector.broadcast %192 : vector<1x128xf32> to vector<8x128xf32>
      %194 = arith.mulf %189, %193 : vector<8x128xf32>
      %195 = arith.addf %184, %194 : vector<8x128xf32>
      %c15_i32_33 = arith.constant 15 : i32
      %196 = tpu.dynamic_rotate %188 by %c15_i32_33 dim 0 : vector<16x128xf32>, i32 -> vector<16x128xf32>
      %197 = vector.extract_strided_slice %196 {offsets = [0, 0], sizes = [8, 128], strides = [1, 1]} : vector<16x128xf32> to vector<8x128xf32>
      %198 = vector.extract_strided_slice %0 {offsets = [3, 1, 0], sizes = [1, 1, 128], strides = [1, 1, 1]} : vector<7x7x128xf32> to vector<1x1x128xf32>
      %199 = vector.shape_cast %198 : vector<1x1x128xf32> to vector<128xf32>
      %200 = vector.shape_cast %199 : vector<128xf32> to vector<1x128xf32>
      %201 = vector.broadcast %200 : vector<1x128xf32> to vector<8x128xf32>
      %202 = arith.mulf %197, %201 : vector<8x128xf32>
      %203 = arith.addf %195, %202 : vector<8x128xf32>
      %c14_i32_34 = arith.constant 14 : i32
      %204 = tpu.dynamic_rotate %188 by %c14_i32_34 dim 0 : vector<16x128xf32>, i32 -> vector<16x128xf32>
      %205 = vector.extract_strided_slice %204 {offsets = [0, 0], sizes = [8, 128], strides = [1, 1]} : vector<16x128xf32> to vector<8x128xf32>
      %206 = vector.extract_strided_slice %0 {offsets = [3, 2, 0], sizes = [1, 1, 128], strides = [1, 1, 1]} : vector<7x7x128xf32> to vector<1x1x128xf32>
      %207 = vector.shape_cast %206 : vector<1x1x128xf32> to vector<128xf32>
      %208 = vector.shape_cast %207 : vector<128xf32> to vector<1x128xf32>
      %209 = vector.broadcast %208 : vector<1x128xf32> to vector<8x128xf32>
      %210 = arith.mulf %205, %209 : vector<8x128xf32>
      %211 = arith.addf %203, %210 : vector<8x128xf32>
      %c13_i32_35 = arith.constant 13 : i32
      %212 = tpu.dynamic_rotate %188 by %c13_i32_35 dim 0 : vector<16x128xf32>, i32 -> vector<16x128xf32>
      %213 = vector.extract_strided_slice %212 {offsets = [0, 0], sizes = [8, 128], strides = [1, 1]} : vector<16x128xf32> to vector<8x128xf32>
      %214 = vector.extract_strided_slice %0 {offsets = [3, 3, 0], sizes = [1, 1, 128], strides = [1, 1, 1]} : vector<7x7x128xf32> to vector<1x1x128xf32>
      %215 = vector.shape_cast %214 : vector<1x1x128xf32> to vector<128xf32>
      %216 = vector.shape_cast %215 : vector<128xf32> to vector<1x128xf32>
      %217 = vector.broadcast %216 : vector<1x128xf32> to vector<8x128xf32>
      %218 = arith.mulf %213, %217 : vector<8x128xf32>
      %219 = arith.addf %211, %218 : vector<8x128xf32>
      %c12_i32_36 = arith.constant 12 : i32
      %220 = tpu.dynamic_rotate %188 by %c12_i32_36 dim 0 : vector<16x128xf32>, i32 -> vector<16x128xf32>
      %221 = vector.extract_strided_slice %220 {offsets = [0, 0], sizes = [8, 128], strides = [1, 1]} : vector<16x128xf32> to vector<8x128xf32>
      %222 = vector.extract_strided_slice %0 {offsets = [3, 4, 0], sizes = [1, 1, 128], strides = [1, 1, 1]} : vector<7x7x128xf32> to vector<1x1x128xf32>
      %223 = vector.shape_cast %222 : vector<1x1x128xf32> to vector<128xf32>
      %224 = vector.shape_cast %223 : vector<128xf32> to vector<1x128xf32>
      %225 = vector.broadcast %224 : vector<1x128xf32> to vector<8x128xf32>
      %226 = arith.mulf %221, %225 : vector<8x128xf32>
      %227 = arith.addf %219, %226 : vector<8x128xf32>
      %c11_i32_37 = arith.constant 11 : i32
      %228 = tpu.dynamic_rotate %188 by %c11_i32_37 dim 0 : vector<16x128xf32>, i32 -> vector<16x128xf32>
      %229 = vector.extract_strided_slice %228 {offsets = [0, 0], sizes = [8, 128], strides = [1, 1]} : vector<16x128xf32> to vector<8x128xf32>
      %230 = vector.extract_strided_slice %0 {offsets = [3, 5, 0], sizes = [1, 1, 128], strides = [1, 1, 1]} : vector<7x7x128xf32> to vector<1x1x128xf32>
      %231 = vector.shape_cast %230 : vector<1x1x128xf32> to vector<128xf32>
      %232 = vector.shape_cast %231 : vector<128xf32> to vector<1x128xf32>
      %233 = vector.broadcast %232 : vector<1x128xf32> to vector<8x128xf32>
      %234 = arith.mulf %229, %233 : vector<8x128xf32>
      %235 = arith.addf %227, %234 : vector<8x128xf32>
      %c10_i32_38 = arith.constant 10 : i32
      %236 = tpu.dynamic_rotate %188 by %c10_i32_38 dim 0 : vector<16x128xf32>, i32 -> vector<16x128xf32>
      %237 = vector.extract_strided_slice %236 {offsets = [0, 0], sizes = [8, 128], strides = [1, 1]} : vector<16x128xf32> to vector<8x128xf32>
      %238 = vector.extract_strided_slice %0 {offsets = [3, 6, 0], sizes = [1, 1, 128], strides = [1, 1, 1]} : vector<7x7x128xf32> to vector<1x1x128xf32>
      %239 = vector.shape_cast %238 : vector<1x1x128xf32> to vector<128xf32>
      %240 = vector.shape_cast %239 : vector<128xf32> to vector<1x128xf32>
      %241 = vector.broadcast %240 : vector<1x128xf32> to vector<8x128xf32>
      %242 = arith.mulf %237, %241 : vector<8x128xf32>
      %243 = arith.addf %235, %242 : vector<8x128xf32>
      %c4_i32 = arith.constant 4 : i32
      %244 = arith.addi %5, %c4_i32 : i32
      %c0_39 = arith.constant 0 : index
      %245 = arith.index_cast %244 : i32 to index
      %c0_40 = arith.constant 0 : index
      %c0_41 = arith.constant 0 : index
      %246 = vector.load %arg2[%c0_39, %245, %c0_40, %c0_41] : memref<1x13x16x128xf32, #tpu.memory_space<vmem>>, vector<1x1x16x128xf32>
      %247 = vector.shape_cast %246 : vector<1x1x16x128xf32> to vector<16x128xf32>
      %248 = vector.extract_strided_slice %247 {offsets = [0, 0], sizes = [8, 128], strides = [1, 1]} : vector<16x128xf32> to vector<8x128xf32>
      %249 = vector.extract_strided_slice %0 {offsets = [4, 0, 0], sizes = [1, 1, 128], strides = [1, 1, 1]} : vector<7x7x128xf32> to vector<1x1x128xf32>
      %250 = vector.shape_cast %249 : vector<1x1x128xf32> to vector<128xf32>
      %251 = vector.shape_cast %250 : vector<128xf32> to vector<1x128xf32>
      %252 = vector.broadcast %251 : vector<1x128xf32> to vector<8x128xf32>
      %253 = arith.mulf %248, %252 : vector<8x128xf32>
      %254 = arith.addf %243, %253 : vector<8x128xf32>
      %c15_i32_42 = arith.constant 15 : i32
      %255 = tpu.dynamic_rotate %247 by %c15_i32_42 dim 0 : vector<16x128xf32>, i32 -> vector<16x128xf32>
      %256 = vector.extract_strided_slice %255 {offsets = [0, 0], sizes = [8, 128], strides = [1, 1]} : vector<16x128xf32> to vector<8x128xf32>
      %257 = vector.extract_strided_slice %0 {offsets = [4, 1, 0], sizes = [1, 1, 128], strides = [1, 1, 1]} : vector<7x7x128xf32> to vector<1x1x128xf32>
      %258 = vector.shape_cast %257 : vector<1x1x128xf32> to vector<128xf32>
      %259 = vector.shape_cast %258 : vector<128xf32> to vector<1x128xf32>
      %260 = vector.broadcast %259 : vector<1x128xf32> to vector<8x128xf32>
      %261 = arith.mulf %256, %260 : vector<8x128xf32>
      %262 = arith.addf %254, %261 : vector<8x128xf32>
      %c14_i32_43 = arith.constant 14 : i32
      %263 = tpu.dynamic_rotate %247 by %c14_i32_43 dim 0 : vector<16x128xf32>, i32 -> vector<16x128xf32>
      %264 = vector.extract_strided_slice %263 {offsets = [0, 0], sizes = [8, 128], strides = [1, 1]} : vector<16x128xf32> to vector<8x128xf32>
      %265 = vector.extract_strided_slice %0 {offsets = [4, 2, 0], sizes = [1, 1, 128], strides = [1, 1, 1]} : vector<7x7x128xf32> to vector<1x1x128xf32>
      %266 = vector.shape_cast %265 : vector<1x1x128xf32> to vector<128xf32>
      %267 = vector.shape_cast %266 : vector<128xf32> to vector<1x128xf32>
      %268 = vector.broadcast %267 : vector<1x128xf32> to vector<8x128xf32>
      %269 = arith.mulf %264, %268 : vector<8x128xf32>
      %270 = arith.addf %262, %269 : vector<8x128xf32>
      %c13_i32_44 = arith.constant 13 : i32
      %271 = tpu.dynamic_rotate %247 by %c13_i32_44 dim 0 : vector<16x128xf32>, i32 -> vector<16x128xf32>
      %272 = vector.extract_strided_slice %271 {offsets = [0, 0], sizes = [8, 128], strides = [1, 1]} : vector<16x128xf32> to vector<8x128xf32>
      %273 = vector.extract_strided_slice %0 {offsets = [4, 3, 0], sizes = [1, 1, 128], strides = [1, 1, 1]} : vector<7x7x128xf32> to vector<1x1x128xf32>
      %274 = vector.shape_cast %273 : vector<1x1x128xf32> to vector<128xf32>
      %275 = vector.shape_cast %274 : vector<128xf32> to vector<1x128xf32>
      %276 = vector.broadcast %275 : vector<1x128xf32> to vector<8x128xf32>
      %277 = arith.mulf %272, %276 : vector<8x128xf32>
      %278 = arith.addf %270, %277 : vector<8x128xf32>
      %c12_i32_45 = arith.constant 12 : i32
      %279 = tpu.dynamic_rotate %247 by %c12_i32_45 dim 0 : vector<16x128xf32>, i32 -> vector<16x128xf32>
      %280 = vector.extract_strided_slice %279 {offsets = [0, 0], sizes = [8, 128], strides = [1, 1]} : vector<16x128xf32> to vector<8x128xf32>
      %281 = vector.extract_strided_slice %0 {offsets = [4, 4, 0], sizes = [1, 1, 128], strides = [1, 1, 1]} : vector<7x7x128xf32> to vector<1x1x128xf32>
      %282 = vector.shape_cast %281 : vector<1x1x128xf32> to vector<128xf32>
      %283 = vector.shape_cast %282 : vector<128xf32> to vector<1x128xf32>
      %284 = vector.broadcast %283 : vector<1x128xf32> to vector<8x128xf32>
      %285 = arith.mulf %280, %284 : vector<8x128xf32>
      %286 = arith.addf %278, %285 : vector<8x128xf32>
      %c11_i32_46 = arith.constant 11 : i32
      %287 = tpu.dynamic_rotate %247 by %c11_i32_46 dim 0 : vector<16x128xf32>, i32 -> vector<16x128xf32>
      %288 = vector.extract_strided_slice %287 {offsets = [0, 0], sizes = [8, 128], strides = [1, 1]} : vector<16x128xf32> to vector<8x128xf32>
      %289 = vector.extract_strided_slice %0 {offsets = [4, 5, 0], sizes = [1, 1, 128], strides = [1, 1, 1]} : vector<7x7x128xf32> to vector<1x1x128xf32>
      %290 = vector.shape_cast %289 : vector<1x1x128xf32> to vector<128xf32>
      %291 = vector.shape_cast %290 : vector<128xf32> to vector<1x128xf32>
      %292 = vector.broadcast %291 : vector<1x128xf32> to vector<8x128xf32>
      %293 = arith.mulf %288, %292 : vector<8x128xf32>
      %294 = arith.addf %286, %293 : vector<8x128xf32>
      %c10_i32_47 = arith.constant 10 : i32
      %295 = tpu.dynamic_rotate %247 by %c10_i32_47 dim 0 : vector<16x128xf32>, i32 -> vector<16x128xf32>
      %296 = vector.extract_strided_slice %295 {offsets = [0, 0], sizes = [8, 128], strides = [1, 1]} : vector<16x128xf32> to vector<8x128xf32>
      %297 = vector.extract_strided_slice %0 {offsets = [4, 6, 0], sizes = [1, 1, 128], strides = [1, 1, 1]} : vector<7x7x128xf32> to vector<1x1x128xf32>
      %298 = vector.shape_cast %297 : vector<1x1x128xf32> to vector<128xf32>
      %299 = vector.shape_cast %298 : vector<128xf32> to vector<1x128xf32>
      %300 = vector.broadcast %299 : vector<1x128xf32> to vector<8x128xf32>
      %301 = arith.mulf %296, %300 : vector<8x128xf32>
      %302 = arith.addf %294, %301 : vector<8x128xf32>
      %c5_i32 = arith.constant 5 : i32
      %303 = arith.addi %5, %c5_i32 : i32
      %c0_48 = arith.constant 0 : index
      %304 = arith.index_cast %303 : i32 to index
      %c0_49 = arith.constant 0 : index
      %c0_50 = arith.constant 0 : index
      %305 = vector.load %arg2[%c0_48, %304, %c0_49, %c0_50] : memref<1x13x16x128xf32, #tpu.memory_space<vmem>>, vector<1x1x16x128xf32>
      %306 = vector.shape_cast %305 : vector<1x1x16x128xf32> to vector<16x128xf32>
      %307 = vector.extract_strided_slice %306 {offsets = [0, 0], sizes = [8, 128], strides = [1, 1]} : vector<16x128xf32> to vector<8x128xf32>
      %308 = vector.extract_strided_slice %0 {offsets = [5, 0, 0], sizes = [1, 1, 128], strides = [1, 1, 1]} : vector<7x7x128xf32> to vector<1x1x128xf32>
      %309 = vector.shape_cast %308 : vector<1x1x128xf32> to vector<128xf32>
      %310 = vector.shape_cast %309 : vector<128xf32> to vector<1x128xf32>
      %311 = vector.broadcast %310 : vector<1x128xf32> to vector<8x128xf32>
      %312 = arith.mulf %307, %311 : vector<8x128xf32>
      %313 = arith.addf %302, %312 : vector<8x128xf32>
      %c15_i32_51 = arith.constant 15 : i32
      %314 = tpu.dynamic_rotate %306 by %c15_i32_51 dim 0 : vector<16x128xf32>, i32 -> vector<16x128xf32>
      %315 = vector.extract_strided_slice %314 {offsets = [0, 0], sizes = [8, 128], strides = [1, 1]} : vector<16x128xf32> to vector<8x128xf32>
      %316 = vector.extract_strided_slice %0 {offsets = [5, 1, 0], sizes = [1, 1, 128], strides = [1, 1, 1]} : vector<7x7x128xf32> to vector<1x1x128xf32>
      %317 = vector.shape_cast %316 : vector<1x1x128xf32> to vector<128xf32>
      %318 = vector.shape_cast %317 : vector<128xf32> to vector<1x128xf32>
      %319 = vector.broadcast %318 : vector<1x128xf32> to vector<8x128xf32>
      %320 = arith.mulf %315, %319 : vector<8x128xf32>
      %321 = arith.addf %313, %320 : vector<8x128xf32>
      %c14_i32_52 = arith.constant 14 : i32
      %322 = tpu.dynamic_rotate %306 by %c14_i32_52 dim 0 : vector<16x128xf32>, i32 -> vector<16x128xf32>
      %323 = vector.extract_strided_slice %322 {offsets = [0, 0], sizes = [8, 128], strides = [1, 1]} : vector<16x128xf32> to vector<8x128xf32>
      %324 = vector.extract_strided_slice %0 {offsets = [5, 2, 0], sizes = [1, 1, 128], strides = [1, 1, 1]} : vector<7x7x128xf32> to vector<1x1x128xf32>
      %325 = vector.shape_cast %324 : vector<1x1x128xf32> to vector<128xf32>
      %326 = vector.shape_cast %325 : vector<128xf32> to vector<1x128xf32>
      %327 = vector.broadcast %326 : vector<1x128xf32> to vector<8x128xf32>
      %328 = arith.mulf %323, %327 : vector<8x128xf32>
      %329 = arith.addf %321, %328 : vector<8x128xf32>
      %c13_i32_53 = arith.constant 13 : i32
      %330 = tpu.dynamic_rotate %306 by %c13_i32_53 dim 0 : vector<16x128xf32>, i32 -> vector<16x128xf32>
      %331 = vector.extract_strided_slice %330 {offsets = [0, 0], sizes = [8, 128], strides = [1, 1]} : vector<16x128xf32> to vector<8x128xf32>
      %332 = vector.extract_strided_slice %0 {offsets = [5, 3, 0], sizes = [1, 1, 128], strides = [1, 1, 1]} : vector<7x7x128xf32> to vector<1x1x128xf32>
      %333 = vector.shape_cast %332 : vector<1x1x128xf32> to vector<128xf32>
      %334 = vector.shape_cast %333 : vector<128xf32> to vector<1x128xf32>
      %335 = vector.broadcast %334 : vector<1x128xf32> to vector<8x128xf32>
      %336 = arith.mulf %331, %335 : vector<8x128xf32>
      %337 = arith.addf %329, %336 : vector<8x128xf32>
      %c12_i32_54 = arith.constant 12 : i32
      %338 = tpu.dynamic_rotate %306 by %c12_i32_54 dim 0 : vector<16x128xf32>, i32 -> vector<16x128xf32>
      %339 = vector.extract_strided_slice %338 {offsets = [0, 0], sizes = [8, 128], strides = [1, 1]} : vector<16x128xf32> to vector<8x128xf32>
      %340 = vector.extract_strided_slice %0 {offsets = [5, 4, 0], sizes = [1, 1, 128], strides = [1, 1, 1]} : vector<7x7x128xf32> to vector<1x1x128xf32>
      %341 = vector.shape_cast %340 : vector<1x1x128xf32> to vector<128xf32>
      %342 = vector.shape_cast %341 : vector<128xf32> to vector<1x128xf32>
      %343 = vector.broadcast %342 : vector<1x128xf32> to vector<8x128xf32>
      %344 = arith.mulf %339, %343 : vector<8x128xf32>
      %345 = arith.addf %337, %344 : vector<8x128xf32>
      %c11_i32_55 = arith.constant 11 : i32
      %346 = tpu.dynamic_rotate %306 by %c11_i32_55 dim 0 : vector<16x128xf32>, i32 -> vector<16x128xf32>
      %347 = vector.extract_strided_slice %346 {offsets = [0, 0], sizes = [8, 128], strides = [1, 1]} : vector<16x128xf32> to vector<8x128xf32>
      %348 = vector.extract_strided_slice %0 {offsets = [5, 5, 0], sizes = [1, 1, 128], strides = [1, 1, 1]} : vector<7x7x128xf32> to vector<1x1x128xf32>
      %349 = vector.shape_cast %348 : vector<1x1x128xf32> to vector<128xf32>
      %350 = vector.shape_cast %349 : vector<128xf32> to vector<1x128xf32>
      %351 = vector.broadcast %350 : vector<1x128xf32> to vector<8x128xf32>
      %352 = arith.mulf %347, %351 : vector<8x128xf32>
      %353 = arith.addf %345, %352 : vector<8x128xf32>
      %c10_i32_56 = arith.constant 10 : i32
      %354 = tpu.dynamic_rotate %306 by %c10_i32_56 dim 0 : vector<16x128xf32>, i32 -> vector<16x128xf32>
      %355 = vector.extract_strided_slice %354 {offsets = [0, 0], sizes = [8, 128], strides = [1, 1]} : vector<16x128xf32> to vector<8x128xf32>
      %356 = vector.extract_strided_slice %0 {offsets = [5, 6, 0], sizes = [1, 1, 128], strides = [1, 1, 1]} : vector<7x7x128xf32> to vector<1x1x128xf32>
      %357 = vector.shape_cast %356 : vector<1x1x128xf32> to vector<128xf32>
      %358 = vector.shape_cast %357 : vector<128xf32> to vector<1x128xf32>
      %359 = vector.broadcast %358 : vector<1x128xf32> to vector<8x128xf32>
      %360 = arith.mulf %355, %359 : vector<8x128xf32>
      %361 = arith.addf %353, %360 : vector<8x128xf32>
      %c6_i32 = arith.constant 6 : i32
      %362 = arith.addi %5, %c6_i32 : i32
      %c0_57 = arith.constant 0 : index
      %363 = arith.index_cast %362 : i32 to index
      %c0_58 = arith.constant 0 : index
      %c0_59 = arith.constant 0 : index
      %364 = vector.load %arg2[%c0_57, %363, %c0_58, %c0_59] : memref<1x13x16x128xf32, #tpu.memory_space<vmem>>, vector<1x1x16x128xf32>
      %365 = vector.shape_cast %364 : vector<1x1x16x128xf32> to vector<16x128xf32>
      %366 = vector.extract_strided_slice %365 {offsets = [0, 0], sizes = [8, 128], strides = [1, 1]} : vector<16x128xf32> to vector<8x128xf32>
      %367 = vector.extract_strided_slice %0 {offsets = [6, 0, 0], sizes = [1, 1, 128], strides = [1, 1, 1]} : vector<7x7x128xf32> to vector<1x1x128xf32>
      %368 = vector.shape_cast %367 : vector<1x1x128xf32> to vector<128xf32>
      %369 = vector.shape_cast %368 : vector<128xf32> to vector<1x128xf32>
      %370 = vector.broadcast %369 : vector<1x128xf32> to vector<8x128xf32>
      %371 = arith.mulf %366, %370 : vector<8x128xf32>
      %372 = arith.addf %361, %371 : vector<8x128xf32>
      %c15_i32_60 = arith.constant 15 : i32
      %373 = tpu.dynamic_rotate %365 by %c15_i32_60 dim 0 : vector<16x128xf32>, i32 -> vector<16x128xf32>
      %374 = vector.extract_strided_slice %373 {offsets = [0, 0], sizes = [8, 128], strides = [1, 1]} : vector<16x128xf32> to vector<8x128xf32>
      %375 = vector.extract_strided_slice %0 {offsets = [6, 1, 0], sizes = [1, 1, 128], strides = [1, 1, 1]} : vector<7x7x128xf32> to vector<1x1x128xf32>
      %376 = vector.shape_cast %375 : vector<1x1x128xf32> to vector<128xf32>
      %377 = vector.shape_cast %376 : vector<128xf32> to vector<1x128xf32>
      %378 = vector.broadcast %377 : vector<1x128xf32> to vector<8x128xf32>
      %379 = arith.mulf %374, %378 : vector<8x128xf32>
      %380 = arith.addf %372, %379 : vector<8x128xf32>
      %c14_i32_61 = arith.constant 14 : i32
      %381 = tpu.dynamic_rotate %365 by %c14_i32_61 dim 0 : vector<16x128xf32>, i32 -> vector<16x128xf32>
      %382 = vector.extract_strided_slice %381 {offsets = [0, 0], sizes = [8, 128], strides = [1, 1]} : vector<16x128xf32> to vector<8x128xf32>
      %383 = vector.extract_strided_slice %0 {offsets = [6, 2, 0], sizes = [1, 1, 128], strides = [1, 1, 1]} : vector<7x7x128xf32> to vector<1x1x128xf32>
      %384 = vector.shape_cast %383 : vector<1x1x128xf32> to vector<128xf32>
      %385 = vector.shape_cast %384 : vector<128xf32> to vector<1x128xf32>
      %386 = vector.broadcast %385 : vector<1x128xf32> to vector<8x128xf32>
      %387 = arith.mulf %382, %386 : vector<8x128xf32>
      %388 = arith.addf %380, %387 : vector<8x128xf32>
      %c13_i32_62 = arith.constant 13 : i32
      %389 = tpu.dynamic_rotate %365 by %c13_i32_62 dim 0 : vector<16x128xf32>, i32 -> vector<16x128xf32>
      %390 = vector.extract_strided_slice %389 {offsets = [0, 0], sizes = [8, 128], strides = [1, 1]} : vector<16x128xf32> to vector<8x128xf32>
      %391 = vector.extract_strided_slice %0 {offsets = [6, 3, 0], sizes = [1, 1, 128], strides = [1, 1, 1]} : vector<7x7x128xf32> to vector<1x1x128xf32>
      %392 = vector.shape_cast %391 : vector<1x1x128xf32> to vector<128xf32>
      %393 = vector.shape_cast %392 : vector<128xf32> to vector<1x128xf32>
      %394 = vector.broadcast %393 : vector<1x128xf32> to vector<8x128xf32>
      %395 = arith.mulf %390, %394 : vector<8x128xf32>
      %396 = arith.addf %388, %395 : vector<8x128xf32>
      %c12_i32_63 = arith.constant 12 : i32
      %397 = tpu.dynamic_rotate %365 by %c12_i32_63 dim 0 : vector<16x128xf32>, i32 -> vector<16x128xf32>
      %398 = vector.extract_strided_slice %397 {offsets = [0, 0], sizes = [8, 128], strides = [1, 1]} : vector<16x128xf32> to vector<8x128xf32>
      %399 = vector.extract_strided_slice %0 {offsets = [6, 4, 0], sizes = [1, 1, 128], strides = [1, 1, 1]} : vector<7x7x128xf32> to vector<1x1x128xf32>
      %400 = vector.shape_cast %399 : vector<1x1x128xf32> to vector<128xf32>
      %401 = vector.shape_cast %400 : vector<128xf32> to vector<1x128xf32>
      %402 = vector.broadcast %401 : vector<1x128xf32> to vector<8x128xf32>
      %403 = arith.mulf %398, %402 : vector<8x128xf32>
      %404 = arith.addf %396, %403 : vector<8x128xf32>
      %c11_i32_64 = arith.constant 11 : i32
      %405 = tpu.dynamic_rotate %365 by %c11_i32_64 dim 0 : vector<16x128xf32>, i32 -> vector<16x128xf32>
      %406 = vector.extract_strided_slice %405 {offsets = [0, 0], sizes = [8, 128], strides = [1, 1]} : vector<16x128xf32> to vector<8x128xf32>
      %407 = vector.extract_strided_slice %0 {offsets = [6, 5, 0], sizes = [1, 1, 128], strides = [1, 1, 1]} : vector<7x7x128xf32> to vector<1x1x128xf32>
      %408 = vector.shape_cast %407 : vector<1x1x128xf32> to vector<128xf32>
      %409 = vector.shape_cast %408 : vector<128xf32> to vector<1x128xf32>
      %410 = vector.broadcast %409 : vector<1x128xf32> to vector<8x128xf32>
      %411 = arith.mulf %406, %410 : vector<8x128xf32>
      %412 = arith.addf %404, %411 : vector<8x128xf32>
      %c10_i32_65 = arith.constant 10 : i32
      %413 = tpu.dynamic_rotate %365 by %c10_i32_65 dim 0 : vector<16x128xf32>, i32 -> vector<16x128xf32>
      %414 = vector.extract_strided_slice %413 {offsets = [0, 0], sizes = [8, 128], strides = [1, 1]} : vector<16x128xf32> to vector<8x128xf32>
      %415 = vector.extract_strided_slice %0 {offsets = [6, 6, 0], sizes = [1, 1, 128], strides = [1, 1, 1]} : vector<7x7x128xf32> to vector<1x1x128xf32>
      %416 = vector.shape_cast %415 : vector<1x1x128xf32> to vector<128xf32>
      %417 = vector.shape_cast %416 : vector<128xf32> to vector<1x128xf32>
      %418 = vector.broadcast %417 : vector<1x128xf32> to vector<8x128xf32>
      %419 = arith.mulf %414, %418 : vector<8x128xf32>
      %420 = arith.addf %412, %419 : vector<8x128xf32>
      %c0_66 = arith.constant 0 : index
      %421 = arith.index_cast %5 : i32 to index
      %c0_67 = arith.constant 0 : index
      %c0_68 = arith.constant 0 : index
      %422 = vector.load %arg5[%c0_66, %421, %c0_67, %c0_68] : memref<1x7x8x128xf32, #tpu.memory_space<vmem>>, vector<1x1x8x128xf32>
      %423 = vector.shape_cast %422 : vector<1x1x8x128xf32> to vector<8x128xf32>
      %424 = vector.shape_cast %420 : vector<8x128xf32> to vector<1x1x8x128xf32>
      tpu.vector_store %arg5[%c0_66, %421, %c0_67, %c0_68], %424 {strides = array<i32>} : memref<1x7x8x128xf32, #tpu.memory_space<vmem>>, vector<1x1x8x128xf32>,
    }
    %c7_i32_4 = arith.constant 7 : i32
    return
  }
  func.func @transform_0(%arg0: i32, %arg1: i32) -> (i32, i32, i32, i32) {
    %c0_i32 = arith.constant 0 : i32
    %c0_i32_0 = arith.constant 0 : i32
    %c0_i32_1 = arith.constant 0 : i32
    return %arg0, %c0_i32, %c0_i32_0, %arg1 : i32, i32, i32, i32
  }
  func.func @transform_1(%arg0: i32, %arg1: i32) -> (i32, i32, i32) {
    %c0_i32 = arith.constant 0 : i32
    %c0_i32_0 = arith.constant 0 : i32
    %c0_i32_1 = arith.constant 0 : i32
    return %c0_i32, %c0_i32_0, %arg1 : i32, i32, i32
  }
  func.func @transform_2(%arg0: i32, %arg1: i32) -> (i32, i32) {
    %c0_i32 = arith.constant 0 : i32
    %c0_i32_0 = arith.constant 0 : i32
    return %c0_i32, %arg1 : i32, i32
  }
  func.func @transform_3(%arg0: i32, %arg1: i32) -> (i32, i32, i32, i32) {
    %c0_i32 = arith.constant 0 : i32
    %c0_i32_0 = arith.constant 0 : i32
    %c0_i32_1 = arith.constant 0 : i32
    return %arg0, %c0_i32, %c0_i32_0, %arg1 : i32, i32, i32, i32
  }
}

</mosaic_0001>

<llo_original>
// kernel: tpu_custom_call.1
$region0: #{tpu_custom_call.1}
  #allocation0 [shape = 'u32[]', space=smem, size = 0x4, offset = 0x4, fixed_abs, tag = 'smem constant byte address 0x4 - core index']
  #allocation1 [shape = 'u32[144,128]{1,0:T(1,128)}', space=vmem, size = 0x12000, scoped, tag = 'internal scratch']
  %s0 = inlined_call_operand.hbm [shape: f32[2,13,16,256], index: 0, kind: input, shape index: {}]
  %s1 = inlined_call_operand.hbm [shape: f32[7,7,256], index: 1, kind: input, shape index: {}]
  %s2 = inlined_call_operand.vmem [shape: f32[1,256], index: 2, kind: input, shape index: {}]
  %s3 = inlined_call_operand.hbm [shape: f32[2,7,8,256], index: 3, kind: output, shape index: {}]
  %s4 = sld [smem:[#allocation0]]
  $region60: #{tpu_custom_call.1} parent=0
    _
  %s6 = ssub.s32 1, %s4
  %s7 = scalar_select 0, %s6, %s4
  $region1: #{tpu_custom_call.1} parent=0
    #allocation2 [shape = 'u8[212992]{0}', space=vmem, size = 0x34000, scoped, tag = 'input window, operand 0']
    #allocation3 [shape = 's32[2]{0}', space=sflag, size = 0x8, scoped, tag = 'scoped memory for tpu_custom_call.1']
    #allocation4 [shape = 's32[2]{0}', space=sflag, size = 0x8, scoped, tag = 'scoped memory for tpu_custom_call.1']
    #allocation5 [shape = 'u8[57344]{0}', space=vmem, size = 0xe000, scoped, tag = 'input window, operand 1']
    #allocation6 [shape = 's32[2]{0}', space=sflag, size = 0x8, scoped, tag = 'scoped memory for tpu_custom_call.1']
    #allocation7 [shape = 'u8[57344]{0}', space=vmem, size = 0xe000, scoped, tag = 'output window, operand 0']
    %8 = vsyncpa [#allocation3], 0
    %s9 = scalar_lea.sflag [#allocation3], 1
    %10 = vsyncpa %s9, 0
    %11 = vsyncpa [#allocation6], 0
    %s12 = scalar_lea.sflag [#allocation6], 1
    %13 = vsyncpa %s12, 0
    %14 = vsyncpa [#allocation4], 0
    %s15 = scalar_lea.sflag [#allocation4], 1
    %16 = vsyncpa %s15, 0
    loop: start=0, step=1, limit=6
    $region2: #{tpu_custom_call.1} parent=1 // loop_pre_header
      _
    $region3: #{tpu_custom_call.1} parent=1 // loop_header
      %s18 = sphi 0, %s22
      %p19 = scmp.ge.s32.totalorder %s18, 6
      %s25 = sphi 0, %s37
      %s26 = sphi 0, %s33
      %s27 = sphi 0, %s25
      %s28 = sphi 0, %s26
      %s29 = sphi 0, %s27
      %s30 = sphi 0, %s28
      %s42 = sphi 0, %s44
      %s45 = sphi 0, %s42
      %s46 = sphi 0, %s45
      %s62 = sphi 0, %s46
      %s68 = sphi 0, %s70
      %s71 = sphi 0, %s68
      %s72 = sphi 0, %s71
      %s88 = sphi 0, %s72
      %s94 = sphi 0, %s96
      %s97 = sphi 0, %s94
      %s98 = sphi 0, %s97
      %s114 = sphi 0, %s98
      %s122 = sphi 0, %s124
      %s125 = sphi 0, %s122
      %s126 = sphi 0, %s125
      %s142 = sphi 0, %s126
    $region4: #{tpu_custom_call.1} parent=1 // loop_header_branch
      %21 = sbr.rel (%p19) target = $region8
    $region5: #{tpu_custom_call.1} parent=1 // loop_body
      %s23 = ssub.s32 %s18, 1
      %s24 = ssub.s32 %s18, 2
      %s31 = sadd.s32 1, %s26
      %p32 = scmp.ge.s32.totalorder %s31, 2
      %s33 = scalar_select %p32, 0, %s31
      %s34 = sadd.s32 1, %s25
      %s35 = scalar_select %p32, %s34, %s25
      %p36 = scmp.ge.s32.totalorder %s35, 2
      %s37 = scalar_select %p36, 0, %s35
      %s38 = ssub.s32 %s25, %s37
      %s39 = ssub.s32 %s26, %s33
      %s40 = sor.u32 %s38, %s39
      %p41 = scmp.eq.s32.totalorder %s40, 0
      %s43 = sadd.s32 %s42, 1
      %s44 = scalar_select %p41, %s42, %s43
      %p47 = pneg %p41
      %p48 = scmp.eq.s32.totalorder %s18, 3
      %p49 = por %p47, %p48
      %p50 = scmp.ne.s32.totalorder %s42, %s45
      %p51 = scmp.eq.s32.totalorder %s18, 0
      %p52 = por %p50, %p51
      %p53 = scmp.ne.s32.totalorder %s42, %s45
      %p54 = scmp.eq.s32.totalorder %s23, 3
      %p55 = por %p53, %p54
      %p56 = scmp.ne.s32.totalorder %s45, %s46
      %p57 = scmp.eq.s32.totalorder %s23, 0
      %p58 = por %p56, %p57
      %p59 = scmp.ne.s32.totalorder %s45, %s46
      %p60 = scmp.eq.s32.totalorder %s24, 3
      %p61 = por %p59, %p60
      %p63 = scmp.ne.s32.totalorder %s46, %s62
      %p64 = scmp.eq.s32.totalorder %s24, 0
      %p65 = por %p63, %p64
      %s66 = ssub.s32 %s26, %s33
      %p67 = scmp.eq.s32.totalorder %s66, 0
      %s69 = sadd.s32 %s68, 1
      %s70 = scalar_select %p67, %s68, %s69
      %p73 = pneg %p67
      %p74 = scmp.eq.s32.totalorder %s18, 3
      %p75 = por %p73, %p74
      %p76 = scmp.ne.s32.totalorder %s68, %s71
      %p77 = scmp.eq.s32.totalorder %s18, 0
      %p78 = por %p76, %p77
      %p79 = scmp.ne.s32.totalorder %s68, %s71
      %p80 = scmp.eq.s32.totalorder %s23, 3
      %p81 = por %p79, %p80
      %p82 = scmp.ne.s32.totalorder %s71, %s72
      %p83 = scmp.eq.s32.totalorder %s23, 0
      %p84 = por %p82, %p83
      %p85 = scmp.ne.s32.totalorder %s71, %s72
      %p86 = scmp.eq.s32.totalorder %s24, 3
      %p87 = por %p85, %p86
      %p89 = scmp.ne.s32.totalorder %s72, %s88
      %p90 = scmp.eq.s32.totalorder %s24, 0
      %p91 = por %p89, %p90
      %s92 = ssub.s32 %s26, %s33
      %p93 = scmp.eq.s32.totalorder %s92, 0
      %s95 = sadd.s32 %s94, 1
      %s96 = scalar_select %p93, %s94, %s95
      %p99 = pneg %p93
      %p100 = scmp.eq.s32.totalorder %s18, 3
      %p101 = por %p99, %p100
      %p102 = scmp.ne.s32.totalorder %s94, %s97
      %p103 = scmp.eq.s32.totalorder %s18, 0
      %p104 = por %p102, %p103
      %p105 = scmp.ne.s32.totalorder %s94, %s97
      %p106 = scmp.eq.s32.totalorder %s23, 3
      %p107 = por %p105, %p106
      %p108 = scmp.ne.s32.totalorder %s97, %s98
      %p109 = scmp.eq.s32.totalorder %s23, 0
      %p110 = por %p108, %p109
      %p111 = scmp.ne.s32.totalorder %s97, %s98
      %p112 = scmp.eq.s32.totalorder %s24, 3
      %p113 = por %p111, %p112
      %p115 = scmp.ne.s32.totalorder %s98, %s114
      %p116 = scmp.eq.s32.totalorder %s24, 0
      %p117 = por %p115, %p116
      %s118 = ssub.s32 %s25, %s37
      %s119 = ssub.s32 %s26, %s33
      %s120 = sor.u32 %s118, %s119
      %p121 = scmp.eq.s32.totalorder %s120, 0
      %s123 = sadd.s32 %s122, 1
      %s124 = scalar_select %p121, %s122, %s123
      %p127 = pneg %p121
      %p128 = scmp.eq.s32.totalorder %s18, 3
      %p129 = por %p127, %p128
      %p130 = scmp.ne.s32.totalorder %s122, %s125
      %p131 = scmp.eq.s32.totalorder %s18, 0
      %p132 = por %p130, %p131
      %p133 = scmp.ne.s32.totalorder %s122, %s125
      %p134 = scmp.eq.s32.totalorder %s23, 3
      %p135 = por %p133, %p134
      %p136 = scmp.ne.s32.totalorder %s125, %s126
      %p137 = scmp.eq.s32.totalorder %s23, 0
      %p138 = por %p136, %p137
      %p139 = scmp.ne.s32.totalorder %s125, %s126
      %p140 = scmp.eq.s32.totalorder %s24, 3
      %p141 = por %p139, %p140
      %p143 = scmp.ne.s32.totalorder %s126, %s142
      %p144 = scmp.eq.s32.totalorder %s24, 0
      %p145 = por %p143, %p144
      %p146 = scmp.le.s32.totalorder 1, %s18
      %p147 = scmp.lt.s32.totalorder %s18, 5
      %p148 = pnand %p146, %p147
      %p149 = pneg %p148
      // Predicated region
      $region9: #{tpu_custom_call.1} parent=5 // pred_check
        _
      $region10: #{tpu_custom_call.1} parent=5 // pred_check_branch
        %151 = sbr.rel (%p148) target = $region12
      $region11: #{tpu_custom_call.1} parent=5 // pred_region
        %s152 = ssub.s32 %s18, 1
      $region12: #{tpu_custom_call.1} parent=5 // pred_fallthru
        _
      %p153 = scmp.lt.s32.totalorder %s18, 4
      // Predicated region
      $region13: #{tpu_custom_call.1} parent=5 // pred_check
        %p154 = pneg %p153
      $region14: #{tpu_custom_call.1} parent=5 // pred_check_branch
        %156 = sbr.rel (%p154) target = $region16
      $region15: #{tpu_custom_call.1} parent=5 // pred_region
        // Predicated region
        $region17: #{tpu_custom_call.1} parent=15 // pred_check
          %p157 = pneg %p52
        $region18: #{tpu_custom_call.1} parent=15 // pred_check_branch
          %159 = sbr.rel (%p157) target = $region20
        $region19: #{tpu_custom_call.1} parent=15 // pred_region
          %s160 = sand.u32 %s42, 1
          %s161 = scalar_lea.sflag [#allocation3], %s160
          %s162 = sand.u32 %s42, 1
          %s163 = smul.addr %s162, 208
          %s164 = scalar_lea.vmem [#allocation2], %s163
          %s166 = ssub.s32 3328, 3328
          %167 = vsyncadd %s161, %s166
          %s168 = smul.addr %s25, 52
          %s169 = sadd.s32 %s26, %s168
          %s170 = smul.addr %s169, 128
          %s171 = scalar_lea.hbm %s0, %s170
          %s172 = sshll.u32 %s164, 4
          %s173 = int_to_ptr.vmem [resolvable:$true] %s172
          %178 = dma.hbm_to_vmem [thread:$0]  %s171, 3328, %s173, %s161, 256, 128, 8
        $region20: #{tpu_custom_call.1} parent=15 // pred_fallthru
          _
        // Predicated region
        $region21: #{tpu_custom_call.1} parent=15 // pred_check
          %p179 = pneg %p78
        $region22: #{tpu_custom_call.1} parent=15 // pred_check_branch
          %181 = sbr.rel (%p179) target = $region24
        $region23: #{tpu_custom_call.1} parent=15 // pred_region
          %s182 = sand.u32 %s68, 1
          %s183 = scalar_lea.sflag [#allocation6], %s182
          %s184 = sand.u32 %s68, 1
          %s185 = smul.addr %s184, 56
          %s186 = scalar_lea.vmem [#allocation5], %s185
          %s188 = ssub.s32 896, 896
          %189 = vsyncadd %s183, %s188
          %s190 = smul.addr %s26, 128
          %s191 = scalar_lea.hbm %s1, %s190
          %s192 = sshll.u32 %s186, 4
          %s193 = int_to_ptr.vmem [resolvable:$true] %s192
          %198 = dma.hbm_to_vmem [thread:$0]  %s191, 896, %s193, %s183, 256, 128, 8
        $region24: #{tpu_custom_call.1} parent=15 // pred_fallthru
          _
        // Predicated region
        $region25: #{tpu_custom_call.1} parent=15 // pred_check
          %p199 = pneg %p104
        $region26: #{tpu_custom_call.1} parent=15 // pred_check_branch
          %201 = sbr.rel (%p199) target = $region28
        $region27: #{tpu_custom_call.1} parent=15 // pred_region
          %p202 = scmp.lt.s32.totalorder %s26, 1
          %s203 = scalar_select %p202, %s26, 1
          %s204 = scalar_lea.vmem %s2, %s203
        $region28: #{tpu_custom_call.1} parent=15 // pred_fallthru
          _
      $region16: #{tpu_custom_call.1} parent=5 // pred_fallthru
        _
      %p205 = scmp.le.s32.totalorder 1, %s18
      %p206 = scmp.lt.s32.totalorder %s18, 5
      %p207 = pnand %p205, %p206
      %p208 = pneg %p207
      // Predicated region
      $region29: #{tpu_custom_call.1} parent=5 // pred_check
        _
      $region30: #{tpu_custom_call.1} parent=5 // pred_check_branch
        %210 = sbr.rel (%p207) target = $region32
      $region31: #{tpu_custom_call.1} parent=5 // pred_region
        %s211 = ssub.s32 %s18, 1
        %s212 = sand.u32 %s45, 1
        %s213 = scalar_lea.sflag [#allocation3], %s212
        %s214 = sand.u32 %s45, 1
        %s215 = smul.addr %s214, 208
        %s216 = scalar_lea.vmem [#allocation2], %s215
        // Predicated region
        $region33: #{tpu_custom_call.1} parent=31 // pred_check
          %p217 = pneg %p58
        $region34: #{tpu_custom_call.1} parent=31 // pred_check_branch
          %219 = sbr.rel (%p217) target = $region36
        $region35: #{tpu_custom_call.1} parent=31 // pred_region
          %220 = dma.done %s213, 3328
        $region36: #{tpu_custom_call.1} parent=31 // pred_fallthru
          _
        %s221 = sand.u32 %s71, 1
        %s222 = scalar_lea.sflag [#allocation6], %s221
        %s223 = sand.u32 %s71, 1
        %s224 = smul.addr %s223, 56
        %s225 = scalar_lea.vmem [#allocation5], %s224
        // Predicated region
        $region37: #{tpu_custom_call.1} parent=31 // pred_check
          %p226 = pneg %p84
        $region38: #{tpu_custom_call.1} parent=31 // pred_check_branch
          %228 = sbr.rel (%p226) target = $region40
        $region39: #{tpu_custom_call.1} parent=31 // pred_region
          %229 = dma.done %s222, 896
        $region40: #{tpu_custom_call.1} parent=31 // pred_fallthru
          _
        %s230 = sand.u32 %s45, 1
        %s231 = scalar_lea.sflag [#allocation3], %s230
        %s232 = sand.u32 %s45, 1
        %s233 = smul.addr %s232, 208
        %s234 = scalar_lea.vmem [#allocation2], %s233
        %p235 = pneg %p58
        %p236 = pneg %p55
        %s237 = sand.u32 %s71, 1
        %s238 = scalar_lea.sflag [#allocation6], %s237
        %s239 = sand.u32 %s71, 1
        %s240 = smul.addr %s239, 56
        %s241 = scalar_lea.vmem [#allocation5], %s240
        %p242 = pneg %p84
        %p243 = pneg %p81
        %p244 = scmp.lt.s32.totalorder %s28, 1
        %s245 = scalar_select %p244, %s28, 1
        %s246 = scalar_lea.vmem %s2, %s245
        %p247 = pneg %p110
        %p248 = pneg %p107
        %p249 = pneg %p138
        %p250 = pneg %p135
        %s251 = sand.u32 %s125, 1
        %s252 = scalar_lea.sflag [#allocation4], %s251
        %s253 = sand.u32 %s125, 1
        %s254 = smul.addr %s253, 56
        %s255 = scalar_lea.vmem [#allocation7], %s254
        %p256 = scmp.lt.s32.totalorder %s28, 1
        %s257 = scalar_select %p256, %s28, 1
        %s258 = scalar_lea.vmem %s2, %s257
        %v259 = vld [vmem:[%s225] sm:$0x7f]
        %v260 = vld [vmem:[%s225 + $0x8] sm:$0x7f]
        %v261 = vld [vmem:[%s225 + $0x10] sm:$0x7f]
        %v262 = vld [vmem:[%s225 + $0x18] sm:$0x7f]
        %v263 = vld [vmem:[%s225 + $0x20] sm:$0x7f]
        %v264 = vld [vmem:[%s225 + $0x28] sm:$0x7f]
        %v265 = vld [vmem:[%s225 + $0x30] sm:$0x7f]
        %v266 = vld [vmem:[%s258] sm:$0x1]
        loop: start=0, step=1, limit=7
        $region41: #{tpu_custom_call.1} parent=31 // loop_pre_header
          _
        $region42: #{tpu_custom_call.1} parent=31 // loop_header
          %s268 = sphi 0, %s272
          %p269 = scmp.ge.s32.totalorder %s268, 7
        $region43: #{tpu_custom_call.1} parent=31 // loop_header_branch
          %271 = sbr.rel (%p269) target = $region47
        $region44: #{tpu_custom_call.1} parent=31 // loop_body
          %v274 = vlaneseq
          %v275 = vshrl.u32 %v274, 7
          %v276 = vsub.s32 0, %v275
          %v277 = vrot.slane %v266, %v276
          %s279 = smul.u32 %s268, 16
          %s280 = scalar_lea.vmem %s216, %s279 [#allocation2]
          %v281 = vld [vmem:[%s280] sm:$0xff]
          %v282 = vld [vmem:[%s280 + $0x8] sm:$0xff]
          %v283 = vlaneseq
          %v284 = vshrl.u32 %v283, 7
          %v285 = vsub.s32 0, %v284
          %v286 = vrot.slane %v259, %v285
          %v287 = vmul.f32 %v281, %v286
          %v288 = vadd.f32 %v277, %v287
          %v289 = vrot.slane %v281, 1
          %v290 = vrot.slane %v282, 1
          %v291 = vlaneseq
          %v292 = vshrl.u32 %v291, 7
          %vm293 = vcmp.lt.s32.totalorder %v292, 7
          %v294 = vsel %vm293, %v289, %v290
          %v295 = vlaneseq
          %v296 = vshrl.u32 %v295, 7
          %v297 = vsub.s32 1, %v296
          %v298 = vrot.slane %v259, %v297
          %v299 = vmul.f32 %v294, %v298
          %v300 = vadd.f32 %v288, %v299
          %v301 = vrot.slane %v281, 2
          %v302 = vrot.slane %v282, 2
          %vm303 = vcmp.lt.s32.totalorder %v292, 6
          %v304 = vsel %vm303, %v301, %v302
          %v305 = vlaneseq
          %v306 = vshrl.u32 %v305, 7
          %v307 = vsub.s32 2, %v306
          %v308 = vrot.slane %v259, %v307
          %v309 = vmul.f32 %v304, %v308
          %v310 = vadd.f32 %v300, %v309
          %v311 = vrot.slane %v281, 3
          %v312 = vrot.slane %v282, 3
          %vm313 = vcmp.lt.s32.totalorder %v292, 5
          %v314 = vsel %vm313, %v311, %v312
          %v315 = vlaneseq
          %v316 = vshrl.u32 %v315, 7
          %v317 = vsub.s32 3, %v316
          %v318 = vrot.slane %v259, %v317
          %v319 = vmul.f32 %v314, %v318
          %v320 = vadd.f32 %v310, %v319
          %v321 = vrot.slane %v281, 4
          %v322 = vrot.slane %v282, 4
          %vm323 = vcmp.lt.s32.totalorder %v292, 4
          %v324 = vsel %vm323, %v321, %v322
          %v325 = vlaneseq
          %v326 = vshrl.u32 %v325, 7
          %v327 = vsub.s32 4, %v326
          %v328 = vrot.slane %v259, %v327
          %v329 = vmul.f32 %v324, %v328
          %v330 = vadd.f32 %v320, %v329
          %v331 = vrot.slane %v281, 5
          %v332 = vrot.slane %v282, 5
          %vm333 = vcmp.lt.s32.totalorder %v292, 3
          %v334 = vsel %vm333, %v331, %v332
          %v335 = vlaneseq
          %v336 = vshrl.u32 %v335, 7
          %v337 = vsub.s32 5, %v336
          %v338 = vrot.slane %v259, %v337
          %v339 = vmul.f32 %v334, %v338
          %v340 = vadd.f32 %v330, %v339
          %v341 = vrot.slane %v281, 6
          %v342 = vrot.slane %v282, 6
          %vm343 = vcmp.lt.s32.totalorder %v292, 2
          %v344 = vsel %vm343, %v341, %v342
          %v345 = vlaneseq
          %v346 = vshrl.u32 %v345, 7
          %v347 = vsub.s32 6, %v346
          %v348 = vrot.slane %v259, %v347
          %v349 = vmul.f32 %v344, %v348
          %v350 = vadd.f32 %v340, %v349
          %s351 = sadd.s32 %s268, 1
          %s352 = smul.u32 %s351, 16
          %s353 = scalar_lea.vmem %s216, %s352 [#allocation2]
          %v354 = vld [vmem:[%s353] sm:$0xff]
          %v355 = vld [vmem:[%s353 + $0x8] sm:$0xff]
          %v356 = vlaneseq
          %v357 = vshrl.u32 %v356, 7
          %v358 = vsub.s32 0, %v357
          %v359 = vrot.slane %v260, %v358
          %v360 = vmul.f32 %v354, %v359
          %v361 = vadd.f32 %v350, %v360
          %v362 = vrot.slane %v354, 1
          %v363 = vrot.slane %v355, 1
          %v364 = vsel %vm293, %v362, %v363
          %v365 = vlaneseq
          %v366 = vshrl.u32 %v365, 7
          %v367 = vsub.s32 1, %v366
          %v368 = vrot.slane %v260, %v367
          %v369 = vmul.f32 %v364, %v368
          %v370 = vadd.f32 %v361, %v369
          %v371 = vrot.slane %v354, 2
          %v372 = vrot.slane %v355, 2
          %v373 = vsel %vm303, %v371, %v372
          %v374 = vlaneseq
          %v375 = vshrl.u32 %v374, 7
          %v376 = vsub.s32 2, %v375
          %v377 = vrot.slane %v260, %v376
          %v378 = vmul.f32 %v373, %v377
          %v379 = vadd.f32 %v370, %v378
          %v380 = vrot.slane %v354, 3
          %v381 = vrot.slane %v355, 3
          %v382 = vsel %vm313, %v380, %v381
          %v383 = vlaneseq
          %v384 = vshrl.u32 %v383, 7
          %v385 = vsub.s32 3, %v384
          %v386 = vrot.slane %v260, %v385
          %v387 = vmul.f32 %v382, %v386
          %v388 = vadd.f32 %v379, %v387
          %v389 = vrot.slane %v354, 4
          %v390 = vrot.slane %v355, 4
          %v391 = vsel %vm323, %v389, %v390
          %v392 = vlaneseq
          %v393 = vshrl.u32 %v392, 7
          %v394 = vsub.s32 4, %v393
          %v395 = vrot.slane %v260, %v394
          %v396 = vmul.f32 %v391, %v395
          %v397 = vadd.f32 %v388, %v396
          %v398 = vrot.slane %v354, 5
          %v399 = vrot.slane %v355, 5
          %v400 = vsel %vm333, %v398, %v399
          %v401 = vlaneseq
          %v402 = vshrl.u32 %v401, 7
          %v403 = vsub.s32 5, %v402
          %v404 = vrot.slane %v260, %v403
          %v405 = vmul.f32 %v400, %v404
          %v406 = vadd.f32 %v397, %v405
          %v407 = vrot.slane %v354, 6
          %v408 = vrot.slane %v355, 6
          %v409 = vsel %vm343, %v407, %v408
          %v410 = vlaneseq
          %v411 = vshrl.u32 %v410, 7
          %v412 = vsub.s32 6, %v411
          %v413 = vrot.slane %v260, %v412
          %v414 = vmul.f32 %v409, %v413
          %v415 = vadd.f32 %v406, %v414
          %s416 = sadd.s32 %s268, 2
          %s417 = smul.u32 %s416, 16
          %s418 = scalar_lea.vmem %s216, %s417 [#allocation2]
          %v419 = vld [vmem:[%s418] sm:$0xff]
          %v420 = vld [vmem:[%s418 + $0x8] sm:$0xff]
          %v421 = vlaneseq
          %v422 = vshrl.u32 %v421, 7
          %v423 = vsub.s32 0, %v422
          %v424 = vrot.slane %v261, %v423
          %v425 = vmul.f32 %v419, %v424
          %v426 = vadd.f32 %v415, %v425
          %v427 = vrot.slane %v419, 1
          %v428 = vrot.slane %v420, 1
          %v429 = vsel %vm293, %v427, %v428
          %v430 = vlaneseq
          %v431 = vshrl.u32 %v430, 7
          %v432 = vsub.s32 1, %v431
          %v433 = vrot.slane %v261, %v432
          %v434 = vmul.f32 %v429, %v433
          %v435 = vadd.f32 %v426, %v434
          %v436 = vrot.slane %v419, 2
          %v437 = vrot.slane %v420, 2
          %v438 = vsel %vm303, %v436, %v437
          %v439 = vlaneseq
          %v440 = vshrl.u32 %v439, 7
          %v441 = vsub.s32 2, %v440
          %v442 = vrot.slane %v261, %v441
          %v443 = vmul.f32 %v438, %v442
          %v444 = vadd.f32 %v435, %v443
          %v445 = vrot.slane %v419, 3
          %v446 = vrot.slane %v420, 3
          %v447 = vsel %vm313, %v445, %v446
          %v448 = vlaneseq
          %v449 = vshrl.u32 %v448, 7
          %v450 = vsub.s32 3, %v449
          %v451 = vrot.slane %v261, %v450
          %v452 = vmul.f32 %v447, %v451
          %v453 = vadd.f32 %v444, %v452
          %v454 = vrot.slane %v419, 4
          %v455 = vrot.slane %v420, 4
          %v456 = vsel %vm323, %v454, %v455
          %v457 = vlaneseq
          %v458 = vshrl.u32 %v457, 7
          %v459 = vsub.s32 4, %v458
          %v460 = vrot.slane %v261, %v459
          %v461 = vmul.f32 %v456, %v460
          %v462 = vadd.f32 %v453, %v461
          %v463 = vrot.slane %v419, 5
          %v464 = vrot.slane %v420, 5
          %v465 = vsel %vm333, %v463, %v464
          %v466 = vlaneseq
          %v467 = vshrl.u32 %v466, 7
          %v468 = vsub.s32 5, %v467
          %v469 = vrot.slane %v261, %v468
          %v470 = vmul.f32 %v465, %v469
          %v471 = vadd.f32 %v462, %v470
          %v472 = vrot.slane %v419, 6
          %v473 = vrot.slane %v420, 6
          %v474 = vsel %vm343, %v472, %v473
          %v475 = vlaneseq
          %v476 = vshrl.u32 %v475, 7
          %v477 = vsub.s32 6, %v476
          %v478 = vrot.slane %v261, %v477
          %v479 = vmul.f32 %v474, %v478
          %v480 = vadd.f32 %v471, %v479
          %s481 = sadd.s32 %s268, 3
          %s482 = smul.u32 %s481, 16
          %s483 = scalar_lea.vmem %s216, %s482 [#allocation2]
          %v484 = vld [vmem:[%s483] sm:$0xff]
          %v485 = vld [vmem:[%s483 + $0x8] sm:$0xff]
          %v486 = vlaneseq
          %v487 = vshrl.u32 %v486, 7
          %v488 = vsub.s32 0, %v487
          %v489 = vrot.slane %v262, %v488
          %v490 = vmul.f32 %v484, %v489
          %v491 = vadd.f32 %v480, %v490
          %v492 = vrot.slane %v484, 1
          %v493 = vrot.slane %v485, 1
          %v494 = vsel %vm293, %v492, %v493
          %v495 = vlaneseq
          %v496 = vshrl.u32 %v495, 7
          %v497 = vsub.s32 1, %v496
          %v498 = vrot.slane %v262, %v497
          %v499 = vmul.f32 %v494, %v498
          %v500 = vadd.f32 %v491, %v499
          %v501 = vrot.slane %v484, 2
          %v502 = vrot.slane %v485, 2
          %v503 = vsel %vm303, %v501, %v502
          %v504 = vlaneseq
          %v505 = vshrl.u32 %v504, 7
          %v506 = vsub.s32 2, %v505
          %v507 = vrot.slane %v262, %v506
          %v508 = vmul.f32 %v503, %v507
          %v509 = vadd.f32 %v500, %v508
          %v510 = vrot.slane %v484, 3
          %v511 = vrot.slane %v485, 3
          %v512 = vsel %vm313, %v510, %v511
          %v513 = vlaneseq
          %v514 = vshrl.u32 %v513, 7
          %v515 = vsub.s32 3, %v514
          %v516 = vrot.slane %v262, %v515
          %v517 = vmul.f32 %v512, %v516
          %v518 = vadd.f32 %v509, %v517
          %v519 = vrot.slane %v484, 4
          %v520 = vrot.slane %v485, 4
          %v521 = vsel %vm323, %v519, %v520
          %v522 = vlaneseq
          %v523 = vshrl.u32 %v522, 7
          %v524 = vsub.s32 4, %v523
          %v525 = vrot.slane %v262, %v524
          %v526 = vmul.f32 %v521, %v525
          %v527 = vadd.f32 %v518, %v526
          %v528 = vrot.slane %v484, 5
          %v529 = vrot.slane %v485, 5
          %v530 = vsel %vm333, %v528, %v529
          %v531 = vlaneseq
          %v532 = vshrl.u32 %v531, 7
          %v533 = vsub.s32 5, %v532
          %v534 = vrot.slane %v262, %v533
          %v535 = vmul.f32 %v530, %v534
          %v536 = vadd.f32 %v527, %v535
          %v537 = vrot.slane %v484, 6
          %v538 = vrot.slane %v485, 6
          %v539 = vsel %vm343, %v537, %v538
          %v540 = vlaneseq
          %v541 = vshrl.u32 %v540, 7
          %v542 = vsub.s32 6, %v541
          %v543 = vrot.slane %v262, %v542
          %v544 = vmul.f32 %v539, %v543
          %v545 = vadd.f32 %v536, %v544
          %s546 = sadd.s32 %s268, 4
          %s547 = smul.u32 %s546, 16
          %s548 = scalar_lea.vmem %s216, %s547 [#allocation2]
          %v549 = vld [vmem:[%s548] sm:$0xff]
          %v550 = vld [vmem:[%s548 + $0x8] sm:$0xff]
          %v551 = vlaneseq
          %v552 = vshrl.u32 %v551, 7
          %v553 = vsub.s32 0, %v552
          %v554 = vrot.slane %v263, %v553
          %v555 = vmul.f32 %v549, %v554
          %v556 = vadd.f32 %v545, %v555
          %v557 = vrot.slane %v549, 1
          %v558 = vrot.slane %v550, 1
          %v559 = vsel %vm293, %v557, %v558
          %v560 = vlaneseq
          %v561 = vshrl.u32 %v560, 7
          %v562 = vsub.s32 1, %v561
          %v563 = vrot.slane %v263, %v562
          %v564 = vmul.f32 %v559, %v563
          %v565 = vadd.f32 %v556, %v564
          %v566 = vrot.slane %v549, 2
          %v567 = vrot.slane %v550, 2
          %v568 = vsel %vm303, %v566, %v567
          %v569 = vlaneseq
          %v570 = vshrl.u32 %v569, 7
          %v571 = vsub.s32 2, %v570
          %v572 = vrot.slane %v263, %v571
          %v573 = vmul.f32 %v568, %v572
          %v574 = vadd.f32 %v565, %v573
          %v575 = vrot.slane %v549, 3
          %v576 = vrot.slane %v550, 3
          %v577 = vsel %vm313, %v575, %v576
          %v578 = vlaneseq
          %v579 = vshrl.u32 %v578, 7
          %v580 = vsub.s32 3, %v579
          %v581 = vrot.slane %v263, %v580
          %v582 = vmul.f32 %v577, %v581
          %v583 = vadd.f32 %v574, %v582
          %v584 = vrot.slane %v549, 4
          %v585 = vrot.slane %v550, 4
          %v586 = vsel %vm323, %v584, %v585
          %v587 = vlaneseq
          %v588 = vshrl.u32 %v587, 7
          %v589 = vsub.s32 4, %v588
          %v590 = vrot.slane %v263, %v589
          %v591 = vmul.f32 %v586, %v590
          %v592 = vadd.f32 %v583, %v591
          %v593 = vrot.slane %v549, 5
          %v594 = vrot.slane %v550, 5
          %v595 = vsel %vm333, %v593, %v594
          %v596 = vlaneseq
          %v597 = vshrl.u32 %v596, 7
          %v598 = vsub.s32 5, %v597
          %v599 = vrot.slane %v263, %v598
          %v600 = vmul.f32 %v595, %v599
          %v601 = vadd.f32 %v592, %v600
          %v602 = vrot.slane %v549, 6
          %v603 = vrot.slane %v550, 6
          %v604 = vsel %vm343, %v602, %v603
          %v605 = vlaneseq
          %v606 = vshrl.u32 %v605, 7
          %v607 = vsub.s32 6, %v606
          %v608 = vrot.slane %v263, %v607
          %v609 = vmul.f32 %v604, %v608
          %v610 = vadd.f32 %v601, %v609
          %s611 = sadd.s32 %s268, 5
          %s612 = smul.u32 %s611, 16
          %s613 = scalar_lea.vmem %s216, %s612 [#allocation2]
          %v614 = vld [vmem:[%s613] sm:$0xff]
          %v615 = vld [vmem:[%s613 + $0x8] sm:$0xff]
          %v616 = vlaneseq
          %v617 = vshrl.u32 %v616, 7
          %v618 = vsub.s32 0, %v617
          %v619 = vrot.slane %v264, %v618
          %v620 = vmul.f32 %v614, %v619
          %v621 = vadd.f32 %v610, %v620
          %v622 = vrot.slane %v614, 1
          %v623 = vrot.slane %v615, 1
          %v624 = vsel %vm293, %v622, %v623
          %v625 = vlaneseq
          %v626 = vshrl.u32 %v625, 7
          %v627 = vsub.s32 1, %v626
          %v628 = vrot.slane %v264, %v627
          %v629 = vmul.f32 %v624, %v628
          %v630 = vadd.f32 %v621, %v629
          %v631 = vrot.slane %v614, 2
          %v632 = vrot.slane %v615, 2
          %v633 = vsel %vm303, %v631, %v632
          %v634 = vlaneseq
          %v635 = vshrl.u32 %v634, 7
          %v636 = vsub.s32 2, %v635
          %v637 = vrot.slane %v264, %v636
          %v638 = vmul.f32 %v633, %v637
          %v639 = vadd.f32 %v630, %v638
          %v640 = vrot.slane %v614, 3
          %v641 = vrot.slane %v615, 3
          %v642 = vsel %vm313, %v640, %v641
          %v643 = vlaneseq
          %v644 = vshrl.u32 %v643, 7
          %v645 = vsub.s32 3, %v644
          %v646 = vrot.slane %v264, %v645
          %v647 = vmul.f32 %v642, %v646
          %v648 = vadd.f32 %v639, %v647
          %v649 = vrot.slane %v614, 4
          %v650 = vrot.slane %v615, 4
          %v651 = vsel %vm323, %v649, %v650
          %v652 = vlaneseq
          %v653 = vshrl.u32 %v652, 7
          %v654 = vsub.s32 4, %v653
          %v655 = vrot.slane %v264, %v654
          %v656 = vmul.f32 %v651, %v655
          %v657 = vadd.f32 %v648, %v656
          %v658 = vrot.slane %v614, 5
          %v659 = vrot.slane %v615, 5
          %v660 = vsel %vm333, %v658, %v659
          %v661 = vlaneseq
          %v662 = vshrl.u32 %v661, 7
          %v663 = vsub.s32 5, %v662
          %v664 = vrot.slane %v264, %v663
          %v665 = vmul.f32 %v660, %v664
          %v666 = vadd.f32 %v657, %v665
          %v667 = vrot.slane %v614, 6
          %v668 = vrot.slane %v615, 6
          %v669 = vsel %vm343, %v667, %v668
          %v670 = vlaneseq
          %v671 = vshrl.u32 %v670, 7
          %v672 = vsub.s32 6, %v671
          %v673 = vrot.slane %v264, %v672
          %v674 = vmul.f32 %v669, %v673
          %v675 = vadd.f32 %v666, %v674
          %s676 = sadd.s32 %s268, 6
          %s677 = smul.u32 %s676, 16
          %s678 = scalar_lea.vmem %s216, %s677 [#allocation2]
          %v679 = vld [vmem:[%s678] sm:$0xff]
          %v680 = vld [vmem:[%s678 + $0x8] sm:$0xff]
          %v681 = vlaneseq
          %v682 = vshrl.u32 %v681, 7
          %v683 = vsub.s32 0, %v682
          %v684 = vrot.slane %v265, %v683
          %v685 = vmul.f32 %v679, %v684
          %v686 = vadd.f32 %v675, %v685
          %v687 = vrot.slane %v679, 1
          %v688 = vrot.slane %v680, 1
          %v689 = vsel %vm293, %v687, %v688
          %v690 = vlaneseq
          %v691 = vshrl.u32 %v690, 7
          %v692 = vsub.s32 1, %v691
          %v693 = vrot.slane %v265, %v692
          %v694 = vmul.f32 %v689, %v693
          %v695 = vadd.f32 %v686, %v694
          %v696 = vrot.slane %v679, 2
          %v697 = vrot.slane %v680, 2
          %v698 = vsel %vm303, %v696, %v697
          %v699 = vlaneseq
          %v700 = vshrl.u32 %v699, 7
          %v701 = vsub.s32 2, %v700
          %v702 = vrot.slane %v265, %v701
          %v703 = vmul.f32 %v698, %v702
          %v704 = vadd.f32 %v695, %v703
          %v705 = vrot.slane %v679, 3
          %v706 = vrot.slane %v680, 3
          %v707 = vsel %vm313, %v705, %v706
          %v708 = vlaneseq
          %v709 = vshrl.u32 %v708, 7
          %v710 = vsub.s32 3, %v709
          %v711 = vrot.slane %v265, %v710
          %v712 = vmul.f32 %v707, %v711
          %v713 = vadd.f32 %v704, %v712
          %v714 = vrot.slane %v679, 4
          %v715 = vrot.slane %v680, 4
          %v716 = vsel %vm323, %v714, %v715
          %v717 = vlaneseq
          %v718 = vshrl.u32 %v717, 7
          %v719 = vsub.s32 4, %v718
          %v720 = vrot.slane %v265, %v719
          %v721 = vmul.f32 %v716, %v720
          %v722 = vadd.f32 %v713, %v721
          %v723 = vrot.slane %v679, 5
          %v724 = vrot.slane %v680, 5
          %v725 = vsel %vm333, %v723, %v724
          %v726 = vlaneseq
          %v727 = vshrl.u32 %v726, 7
          %v728 = vsub.s32 5, %v727
          %v729 = vrot.slane %v265, %v728
          %v730 = vmul.f32 %v725, %v729
          %v731 = vadd.f32 %v722, %v730
          %v732 = vrot.slane %v679, 6
          %v733 = vrot.slane %v680, 6
          %v734 = vsel %vm343, %v732, %v733
          %v735 = vlaneseq
          %v736 = vshrl.u32 %v735, 7
          %v737 = vsub.s32 6, %v736
          %v738 = vrot.slane %v265, %v737
          %v739 = vmul.f32 %v734, %v738
          %v740 = vadd.f32 %v731, %v739
          %s741 = smul.u32 %s268, 8
          %s742 = scalar_lea.vmem %s255, %s741 [#allocation7]
          %743 = vst [vmem:[%s742] sm:$0xff] %v740
        $region45: #{tpu_custom_call.1} parent=31 // loop_footer
          %s272 = sadd.s32 1, %s268
        $region46: #{tpu_custom_call.1} parent=31 // loop_footer_branch
          %267 = sbr.rel target = $region42
        $region47: #{tpu_custom_call.1} parent=31 // loop_exit
          _
        %s744 = sand.u32 %s125, 1
        %s745 = scalar_lea.sflag [#allocation4], %s744
        %s746 = sand.u32 %s125, 1
        %s747 = smul.addr %s746, 56
        %s748 = scalar_lea.vmem [#allocation7], %s747
        // Predicated region
        $region48: #{tpu_custom_call.1} parent=31 // pred_check
          %p749 = pneg %p135
        $region49: #{tpu_custom_call.1} parent=31 // pred_check_branch
          %751 = sbr.rel (%p749) target = $region51
        $region50: #{tpu_custom_call.1} parent=31 // pred_region
          %s753 = ssub.s32 896, 896
          %754 = vsyncadd %s745, %s753
          %s755 = smul.addr %s27, 14
          %s756 = sadd.s32 %s28, %s755
          %s757 = smul.addr %s756, 128
          %s758 = scalar_lea.hbm %s3, %s757
          %s759 = sshll.u32 %s748, 4
          %s760 = int_to_ptr.vmem [resolvable:$true] %s759
          %765 = dma.vmem_to_hbm [thread:$0]  %s760, 896, %s758, %s745, 128, 256, 8
        $region51: #{tpu_custom_call.1} parent=31 // pred_fallthru
          _
      $region32: #{tpu_custom_call.1} parent=5 // pred_fallthru
        _
      %p766 = scmp.le.s32.totalorder 2, %s18
      // Predicated region
      $region52: #{tpu_custom_call.1} parent=5 // pred_check
        %p767 = pneg %p766
      $region53: #{tpu_custom_call.1} parent=5 // pred_check_branch
        %769 = sbr.rel (%p767) target = $region55
      $region54: #{tpu_custom_call.1} parent=5 // pred_region
        %s770 = ssub.s32 %s18, 2
        // Predicated region
        $region56: #{tpu_custom_call.1} parent=54 // pred_check
          %p771 = pneg %p141
        $region57: #{tpu_custom_call.1} parent=54 // pred_check_branch
          %773 = sbr.rel (%p771) target = $region59
        $region58: #{tpu_custom_call.1} parent=54 // pred_region
          %s774 = sand.u32 %s126, 1
          %s775 = scalar_lea.sflag [#allocation4], %s774
          %s776 = sand.u32 %s126, 1
          %s777 = smul.addr %s776, 56
          %s778 = scalar_lea.vmem [#allocation7], %s777
          %779 = dma.done %s775, 896
        $region59: #{tpu_custom_call.1} parent=54 // pred_fallthru
          _
      $region55: #{tpu_custom_call.1} parent=5 // pred_fallthru
        _
    $region6: #{tpu_custom_call.1} parent=1 // loop_footer
      %s22 = sadd.s32 1, %s18
    $region7: #{tpu_custom_call.1} parent=1 // loop_footer_branch
      %17 = sbr.rel target = $region3
    $region8: #{tpu_custom_call.1} parent=1 // loop_exit
      _
    %780 = vsyncpa [#allocation3], 1
    %s781 = scalar_lea.sflag [#allocation3], 1
    %782 = vsyncpa %s781, 1
    %783 = vsyncpa [#allocation6], 1
    %s784 = scalar_lea.sflag [#allocation6], 1
    %785 = vsyncpa %s784, 1
    %786 = vsyncpa [#allocation4], 1
    %s787 = scalar_lea.sflag [#allocation4], 1
    %788 = vsyncpa %s787, 1

</llo_original>
